<compile_context>
chip_gen: v7x
topology: tpu7x:2x2x1
jax: 0.10.0
libtpu: 0.0.40
codegen_flags: <defaults>
</compile_context>

<pallas_src>
import jax
import jax.numpy as jnp
from jax.experimental import pallas as pl
from jax.experimental.pallas import tpu as pltpu

INPUT_SZ = 32 * 32 * 3   # 3072
N_CLASSES = 10
LANE = 128


def _linear_kernel(x_ref, w_ref, b_ref, o_ref):
    # x: (B, K) f32 -> cast to bf16 to feed the MXU at native bf16 rate.
    # w: (K, Np) bf16 (pre-transposed, pre-padded parameter).
    # b: (1, Np) f32.  Accumulation and output stay f32.
    x = x_ref[...].astype(jnp.bfloat16)
    acc = jnp.dot(x, w_ref[...], preferred_element_type=jnp.float32)
    o_ref[...] = (acc + b_ref[...]).astype(o_ref.dtype)


def prepare_params(w, b):
    """One-time parameter prep: W (N, K) -> bf16 W^T padded to (K, Np); b -> (1, Np) f32."""
    N, K = w.shape
    Np = ((N + LANE - 1) // LANE) * LANE
    wt_p = jnp.zeros((K, Np), jnp.bfloat16).at[:, :N].set(w.T.astype(jnp.bfloat16))
    b_p = jnp.zeros((1, Np), jnp.float32).at[0, :N].set(b.astype(jnp.float32))
    return wt_p, b_p


def base_model_forward(x, wt_p, b_p, n_classes=N_CLASSES):
    """x: (B, 3, 32, 32) NCHW float32. wt_p/b_p: outputs of prepare_params."""
    B = x.shape[0]
    x2 = x.reshape(B, -1)              # == torch .view(-1, 32*32*3)
    K, Np = wt_p.shape
    assert x2.shape[1] == K

    out = pl.pallas_call(
        _linear_kernel,
        out_shape=jax.ShapeDtypeStruct((B, Np), jnp.float32),
        grid=(1,),                      # whole problem fits VMEM: one step, no scratch
        in_specs=[
            pl.BlockSpec((B, K), lambda i: (0, 0)),    # activations (full, unpadded B)
            pl.BlockSpec((K, Np), lambda i: (0, 0)),   # bf16 W^T (resident, full)
            pl.BlockSpec((1, Np), lambda i: (0, 0)),   # bias
        ],
        out_specs=pl.BlockSpec((B, Np), lambda i: (0, 0)),
        compiler_params=pltpu.CompilerParams(
            dimension_semantics=("arbitrary",),
        ),
    )(x2, wt_p, b_p)
    # TODO(synk): at large batch, grid over M with dimension_semantics=("parallel",)
    # so v7x's two TensorCores split the rows; at B=2 a single step is optimal.
    return out[:, :n_classes]


if __name__ == "__main__":
    key = jax.random.PRNGKey(0)
    kx, kw, kb = jax.random.split(key, 3)

    # batch=2 CIFAR-shaped input, consistent with the module.
    x = jax.random.normal(kx, (2, 3, 32, 32), dtype=jnp.float32)

    # nn.Linear-style uniform(-1/sqrt(fan_in), 1/sqrt(fan_in)) init.
    bound = 1.0 / (INPUT_SZ ** 0.5)
    w = jax.random.uniform(kw, (N_CLASSES, INPUT_SZ), jnp.float32, -bound, bound)
    b = jax.random.uniform(kb, (N_CLASSES,), jnp.float32, -bound, bound)

    wt_p, b_p = prepare_params(w, b)       # done once, outside the forward
    y = base_model_forward(x, wt_p, b_p)
    y = jax.block_until_ready(y)

    # References: exact f32 (module semantics) and bf16-rounded-input emulation
    # (kernel numerics: bf16 operands, f32 accumulation).
    x2 = x.reshape(2, -1)
    y_f32 = x2 @ w.T + b
    y_bf16 = (x2.astype(jnp.bfloat16).astype(jnp.float32)
              @ w.T.astype(jnp.bfloat16).astype(jnp.float32)) + b

    assert y.shape == (2, N_CLASSES)
    assert jnp.allclose(y, y_bf16, atol=1e-3, rtol=1e-3), "mismatch vs bf16 reference"
    assert jnp.allclose(y, y_f32, atol=5e-2, rtol=5e-2), "mismatch vs f32 reference"

    print("KERNEL_OK")
</pallas_src>

<mosaic_0001>
module attributes {stable_mosaic.version = 11 : i64} {
  func.func @_linear_kernel(%arg0: i32, %arg1: memref<2x3072xf32, #tpu.memory_space<vmem>>, %arg2: memref<3072x128xbf16, #tpu.memory_space<vmem>>, %arg3: memref<1x128xf32, #tpu.memory_space<vmem>>, %arg4: memref<2x128xf32, #tpu.memory_space<vmem>>) attributes {dimension_semantics = [#tpu.dimension_semantics<arbitrary>], iteration_bounds = array<i64: 1>, scalar_prefetch = 0 : i64, scratch_operands = 0 : i64, tpu.core_type = #tpu.core_type<tc>, window_params = [{pipeline_mode = #tpu.pipeline_mode<synchronous>, transform_indices = @transform_0, window_bounds = array<i64: 2, 3072>}, {pipeline_mode = #tpu.pipeline_mode<synchronous>, transform_indices = @transform_1, window_bounds = array<i64: 3072, 128>}, {pipeline_mode = #tpu.pipeline_mode<synchronous>, transform_indices = @transform_2, window_bounds = array<i64: 1, 128>}, {pipeline_mode = #tpu.pipeline_mode<synchronous>, transform_indices = @transform_3, window_bounds = array<i64: 2, 128>}]} {
    %c0 = arith.constant 0 : index
    %c0_0 = arith.constant 0 : index
    %0 = vector.load %arg1[%c0, %c0_0] : memref<2x3072xf32, #tpu.memory_space<vmem>>, vector<2x3072xf32>
    %1 = arith.truncf %0 : vector<2x3072xf32> to vector<2x3072xbf16>
    %c0_1 = arith.constant 0 : index
    %c0_2 = arith.constant 0 : index
    %2 = vector.load %arg2[%c0_1, %c0_2] : memref<3072x128xbf16, #tpu.memory_space<vmem>>, vector<3072x128xbf16>
    %cst = arith.constant dense<0.000000e+00> : vector<2x128xf32>
    %3 = tpu.matmul %1, %2, %cst {dimension_numbers = #tpu.dot_dimension_numbers<[1], [0], [0], [1], [0, 0, 1, 1], [], []>} : vector<2x3072xbf16>, vector<3072x128xbf16>, vector<2x128xf32> -> vector<2x128xf32>
    %c0_3 = arith.constant 0 : index
    %c0_4 = arith.constant 0 : index
    %4 = vector.load %arg3[%c0_3, %c0_4] : memref<1x128xf32, #tpu.memory_space<vmem>>, vector<1x128xf32>
    %5 = vector.broadcast %4 : vector<1x128xf32> to vector<2x128xf32>
    %6 = arith.addf %3, %5 : vector<2x128xf32>
    %c0_5 = arith.constant 0 : index
    %c0_6 = arith.constant 0 : index
    %7 = vector.load %arg4[%c0_5, %c0_6] : memref<2x128xf32, #tpu.memory_space<vmem>>, vector<2x128xf32>
    tpu.vector_store %arg4[%c0_5, %c0_6], %6 {strides = array<i32>} : memref<2x128xf32, #tpu.memory_space<vmem>>, vector<2x128xf32>,
    return
  }
  func.func @transform_0(%arg0: i32) -> (i32, i32) {
    %c0_i32 = arith.constant 0 : i32
    %c0_i32_0 = arith.constant 0 : i32
    %c0_i32_1 = arith.constant 0 : i32
    return %c0_i32, %c0_i32_0 : i32, i32
  }
  func.func @transform_1(%arg0: i32) -> (i32, i32) {
    %c0_i32 = arith.constant 0 : i32
    %c0_i32_0 = arith.constant 0 : i32
    %c0_i32_1 = arith.constant 0 : i32
    return %c0_i32, %c0_i32_0 : i32, i32
  }
  func.func @transform_2(%arg0: i32) -> (i32, i32) {
    %c0_i32 = arith.constant 0 : i32
    %c0_i32_0 = arith.constant 0 : i32
    %c0_i32_1 = arith.constant 0 : i32
    return %c0_i32, %c0_i32_0 : i32, i32
  }
  func.func @transform_3(%arg0: i32) -> (i32, i32) {
    %c0_i32 = arith.constant 0 : i32
    %c0_i32_0 = arith.constant 0 : i32
    %c0_i32_1 = arith.constant 0 : i32
    return %c0_i32, %c0_i32_0 : i32, i32
  }
}

</mosaic_0001>

<llo_original>
// kernel: tpu_custom_call.1
$region0: #{tpu_custom_call.1}
  #allocation0 [shape = 'u32[]', space=smem, size = 0x4, offset = 0x4, fixed_abs, tag = 'smem constant byte address 0x4 - core index']
  #allocation1 [shape = 'u32[144,128]{1,0:T(1,128)}', space=vmem, size = 0x12000, scoped, tag = 'internal scratch']
  %s0 = inlined_call_operand.hbm [shape: f32[2,3072], index: 0, kind: input, shape index: {}]
  %s1 = inlined_call_operand.hbm [shape: bf16[3072,128], index: 1, kind: input, shape index: {}]
  %s2 = inlined_call_operand.vmem [shape: f32[1,128], index: 2, kind: input, shape index: {}]
  %s3 = inlined_call_operand.hbm [shape: f32[2,128], index: 3, kind: output, shape index: {}]
  %s4 = sld [smem:[#allocation0]]
  $region30: #{tpu_custom_call.1} parent=0
    _
  %s6 = ssub.s32 1, %s4
  %s7 = scalar_select 0, %s6, %s4
  $region1: #{tpu_custom_call.1} parent=0
    #allocation2 [shape = 'u8[24576]{0}', space=vmem, size = 0x6000, scoped, tag = 'input window, operand 0, single buffered']
    #allocation3 [shape = 's32[1]{0}', space=sflag, size = 0x4, scoped, tag = 'scoped memory for tpu_custom_call.1']
    #allocation4 [shape = 's32[1]{0}', space=sflag, size = 0x4, scoped, tag = 'scoped memory for tpu_custom_call.1']
    #allocation5 [shape = 'u8[786432]{0}', space=vmem, size = 0xc0000, scoped, tag = 'input window, operand 1, single buffered']
    #allocation6 [shape = 's32[1]{0}', space=sflag, size = 0x4, scoped, tag = 'scoped memory for tpu_custom_call.1']
    #allocation7 [shape = 'u8[1024]{0}', space=vmem, size = 0x400, scoped, tag = 'output window, operand 0, single buffered']
    %8 = vsyncpa [#allocation3], 0
    %9 = vsyncpa [#allocation6], 0
    %10 = vsyncpa [#allocation4], 0
    // Predicated region
    $region2: #{tpu_custom_call.1} parent=1 // pred_check
      _
    $region3: #{tpu_custom_call.1} parent=1 // pred_check_branch
      %12 = sbr.rel (0) target = $region5
    $region4: #{tpu_custom_call.1} parent=1 // pred_region
      %s14 = ssub.s32 768, 768
      %15 = vsyncadd [#allocation3], %s14
      %s17 = sshll.u32 [#allocation2], 4
      %s18 = int_to_ptr.vmem [resolvable:$true] %s17
      %20 = dma.hbm_to_vmem [thread:$0]  %s0, 768, %s18, [#allocation3]
    $region5: #{tpu_custom_call.1} parent=1 // pred_fallthru
      _
    // Predicated region
    $region6: #{tpu_custom_call.1} parent=1 // pred_check
      _
    $region7: #{tpu_custom_call.1} parent=1 // pred_check_branch
      %22 = sbr.rel (0) target = $region9
    $region8: #{tpu_custom_call.1} parent=1 // pred_region
      %s24 = ssub.s32 24576, 24576
      %25 = vsyncadd [#allocation6], %s24
      %s26 = sshll.u32 [#allocation5], 4
      %s27 = int_to_ptr.vmem [resolvable:$true] %s26
      %32 = dma.hbm_to_vmem [thread:$0]  %s1, 24576, %s27, [#allocation6], 64, 64, 4
    $region9: #{tpu_custom_call.1} parent=1 // pred_fallthru
      _
    // Predicated region
    $region10: #{tpu_custom_call.1} parent=1 // pred_check
      _
    $region11: #{tpu_custom_call.1} parent=1 // pred_check_branch
      %34 = sbr.rel (0) target = $region13
    $region12: #{tpu_custom_call.1} parent=1 // pred_region
      _
    $region13: #{tpu_custom_call.1} parent=1 // pred_fallthru
      _
    // Predicated region
    $region14: #{tpu_custom_call.1} parent=1 // pred_check
      _
    $region15: #{tpu_custom_call.1} parent=1 // pred_check_branch
      %36 = sbr.rel (0) target = $region17
    $region16: #{tpu_custom_call.1} parent=1 // pred_region
      %37 = dma.done [#allocation3], 768
    $region17: #{tpu_custom_call.1} parent=1 // pred_fallthru
      _
    // Predicated region
    $region18: #{tpu_custom_call.1} parent=1 // pred_check
      _
    $region19: #{tpu_custom_call.1} parent=1 // pred_check_branch
      %39 = sbr.rel (0) target = $region21
    $region20: #{tpu_custom_call.1} parent=1 // pred_region
      %40 = dma.done [#allocation6], 24576
    $region21: #{tpu_custom_call.1} parent=1 // pred_fallthru
      _
    %v42 = vld [vmem:[#allocation2] sm:$0xff]
    %v43 = vld [vmem:[#allocation2 + $0x8] sm:$0xff]
    %v44 = vld [vmem:[#allocation2 + $0x10] sm:$0xff]
    %v45 = vld [vmem:[#allocation2 + $0x18] sm:$0xff]
    %v46 = vld [vmem:[#allocation2 + $0x20] sm:$0xff]
    %v47 = vld [vmem:[#allocation2 + $0x28] sm:$0xff]
    %v54 = vcombine.high %v42, %v42
    %v56 = vunpack.c.l.s4 1983009808
    %v57 = vunpack.c.0.s8 %v56
    %v58 = vlaneseq
    %v59 = vshrl.u32 %v58, 7
    %v60 = vsub.s32 %v57, %v59
    %v61 = vrot.slane %v42, %v60
    %v63 = vunpack.c.l.s4 1983009808
    %v64 = vunpack.c.0.s8 %v63
    %v65 = vlaneseq
    %v66 = vshrl.u32 %v65, 7
    %v67 = vsub.s32 %v64, %v66
    %v68 = vrot.slane %v54, %v67
    %v69 = vcombine.high %v61, %v61
    %v70 = vcombine.high %v68, %v68
    %v71 = vcombine.high %v43, %v43
    %v73 = vunpack.c.l.s4 1983009808
    %v74 = vunpack.c.0.s8 %v73
    %v75 = vlaneseq
    %v76 = vshrl.u32 %v75, 7
    %v77 = vsub.s32 %v74, %v76
    %v78 = vrot.slane %v43, %v77
    %v80 = vunpack.c.l.s4 1983009808
    %v81 = vunpack.c.0.s8 %v80
    %v82 = vlaneseq
    %v83 = vshrl.u32 %v82, 7
    %v84 = vsub.s32 %v81, %v83
    %v85 = vrot.slane %v71, %v84
    %v86 = vcombine.high %v78, %v78
    %v87 = vcombine.high %v85, %v85
    %v88 = vcombine.high %v44, %v44
    %v90 = vunpack.c.l.s4 1983009808
    %v91 = vunpack.c.0.s8 %v90
    %v92 = vlaneseq
    %v93 = vshrl.u32 %v92, 7
    %v94 = vsub.s32 %v91, %v93
    %v95 = vrot.slane %v44, %v94
    %v97 = vunpack.c.l.s4 1983009808
    %v98 = vunpack.c.0.s8 %v97
    %v99 = vlaneseq
    %v100 = vshrl.u32 %v99, 7
    %v101 = vsub.s32 %v98, %v100
    %v102 = vrot.slane %v88, %v101
    %v103 = vcombine.high %v95, %v95
    %v104 = vcombine.high %v102, %v102
    %v105 = vcombine.high %v45, %v45
    %v107 = vunpack.c.l.s4 1983009808
    %v108 = vunpack.c.0.s8 %v107
    %v109 = vlaneseq
    %v110 = vshrl.u32 %v109, 7
    %v111 = vsub.s32 %v108, %v110
    %v112 = vrot.slane %v45, %v111
    %v114 = vunpack.c.l.s4 1983009808
    %v115 = vunpack.c.0.s8 %v114
    %v116 = vlaneseq
    %v117 = vshrl.u32 %v116, 7
    %v118 = vsub.s32 %v115, %v117
    %v119 = vrot.slane %v105, %v118
    %v120 = vcombine.high %v112, %v112
    %v121 = vcombine.high %v119, %v119
    %v122 = vcombine.high %v46, %v46
    %v124 = vunpack.c.l.s4 1983009808
    %v125 = vunpack.c.0.s8 %v124
    %v126 = vlaneseq
    %v127 = vshrl.u32 %v126, 7
    %v128 = vsub.s32 %v125, %v127
    %v129 = vrot.slane %v46, %v128
    %v131 = vunpack.c.l.s4 1983009808
    %v132 = vunpack.c.0.s8 %v131
    %v133 = vlaneseq
    %v134 = vshrl.u32 %v133, 7
    %v135 = vsub.s32 %v132, %v134
    %v136 = vrot.slane %v122, %v135
    %v137 = vcombine.high %v129, %v129
    %v138 = vcombine.high %v136, %v136
    %v139 = vcombine.high %v47, %v47
    %v141 = vunpack.c.l.s4 1983009808
    %v142 = vunpack.c.0.s8 %v141
    %v143 = vlaneseq
    %v144 = vshrl.u32 %v143, 7
    %v145 = vsub.s32 %v142, %v144
    %v146 = vrot.slane %v47, %v145
    %v148 = vunpack.c.l.s4 1983009808
    %v149 = vunpack.c.0.s8 %v148
    %v150 = vlaneseq
    %v151 = vshrl.u32 %v150, 7
    %v152 = vsub.s32 %v149, %v151
    %v153 = vrot.slane %v139, %v152
    %v154 = vcombine.high %v146, %v146
    %v155 = vcombine.high %v153, %v153
    %v180 = vpack.c.bf16 %v61, %v61
    %v181 = vpack.c.bf16 %v69, %v69
    %v182 = vpack.c.bf16 %v68, %v68
    %v183 = vpack.c.bf16 %v70, %v70
    %v184 = vpack.c.bf16 %v78, %v78
    %v185 = vpack.c.bf16 %v86, %v86
    %v186 = vpack.c.bf16 %v85, %v85
    %v187 = vpack.c.bf16 %v87, %v87
    %v188 = vpack.c.bf16 %v95, %v95
    %v189 = vpack.c.bf16 %v103, %v103
    %v190 = vpack.c.bf16 %v102, %v102
    %v191 = vpack.c.bf16 %v104, %v104
    %v192 = vpack.c.bf16 %v112, %v112
    %v193 = vpack.c.bf16 %v120, %v120
    %v194 = vpack.c.bf16 %v119, %v119
    %v195 = vpack.c.bf16 %v121, %v121
    %v196 = vpack.c.bf16 %v129, %v129
    %v197 = vpack.c.bf16 %v137, %v137
    %v198 = vpack.c.bf16 %v136, %v136
    %v199 = vpack.c.bf16 %v138, %v138
    %v200 = vpack.c.bf16 %v146, %v146
    %v201 = vpack.c.bf16 %v154, %v154
    %v202 = vpack.c.bf16 %v153, %v153
    %v203 = vpack.c.bf16 %v155, %v155
    %v204 = vld [vmem:[#allocation5] sm:$0xf]
    %v205 = vld [vmem:[#allocation5 + $0x4] sm:$0xf]
    %v206 = vld [vmem:[#allocation5 + $0x8] sm:$0xf]
    %v207 = vld [vmem:[#allocation5 + $0xc] sm:$0xf]
    %v208 = vld [vmem:[#allocation5 + $0x10] sm:$0xf]
    %v209 = vld [vmem:[#allocation5 + $0x14] sm:$0xf]
    %v210 = vld [vmem:[#allocation5 + $0x18] sm:$0xf]
    %v211 = vld [vmem:[#allocation5 + $0x1c] sm:$0xf]
    %v212 = vld [vmem:[#allocation5 + $0x20] sm:$0xf]
    %v213 = vld [vmem:[#allocation5 + $0x24] sm:$0xf]
    %v214 = vld [vmem:[#allocation5 + $0x28] sm:$0xf]
    %v215 = vld [vmem:[#allocation5 + $0x2c] sm:$0xf]
    %v216 = vld [vmem:[#allocation5 + $0x30] sm:$0xf]
    %v217 = vld [vmem:[#allocation5 + $0x34] sm:$0xf]
    %v218 = vld [vmem:[#allocation5 + $0x38] sm:$0xf]
    %v219 = vld [vmem:[#allocation5 + $0x3c] sm:$0xf]
    %v220 = vld [vmem:[#allocation5 + $0x40] sm:$0xf]
    %v221 = vld [vmem:[#allocation5 + $0x44] sm:$0xf]
    %v222 = vld [vmem:[#allocation5 + $0x48] sm:$0xf]
    %v223 = vld [vmem:[#allocation5 + $0x4c] sm:$0xf]
    %v224 = vld [vmem:[#allocation5 + $0x50] sm:$0xf]
    %v225 = vld [vmem:[#allocation5 + $0x54] sm:$0xf]
    %v226 = vld [vmem:[#allocation5 + $0x58] sm:$0xf]
    %v227 = vld [vmem:[#allocation5 + $0x5c] sm:$0xf]
    %v228 = vld [vmem:[#allocation5 + $0x60] sm:$0xf]
    %v229 = vld [vmem:[#allocation5 + $0x64] sm:$0xf]
    %v230 = vld [vmem:[#allocation5 + $0x68] sm:$0xf]
    %v231 = vld [vmem:[#allocation5 + $0x6c] sm:$0xf]
    %v232 = vld [vmem:[#allocation5 + $0x70] sm:$0xf]
    %v233 = vld [vmem:[#allocation5 + $0x74] sm:$0xf]
    %v234 = vld [vmem:[#allocation5 + $0x78] sm:$0xf]
    %v235 = vld [vmem:[#allocation5 + $0x7c] sm:$0xf]
    %v236 = vld [vmem:[#allocation5 + $0x80] sm:$0xf]
    %v237 = vld [vmem:[#allocation5 + $0x84] sm:$0xf]
    %v238 = vld [vmem:[#allocation5 + $0x88] sm:$0xf]
    %v239 = vld [vmem:[#allocation5 + $0x8c] sm:$0xf]
    %v240 = vld [vmem:[#allocation5 + $0x90] sm:$0xf]
    %v241 = vld [vmem:[#allocation5 + $0x94] sm:$0xf]
    %v242 = vld [vmem:[#allocation5 + $0x98] sm:$0xf]
    %v243 = vld [vmem:[#allocation5 + $0x9c] sm:$0xf]
    %v244 = vld [vmem:[#allocation5 + $0xa0] sm:$0xf]
    %v245 = vld [vmem:[#allocation5 + $0xa4] sm:$0xf]
    %v246 = vld [vmem:[#allocation5 + $0xa8] sm:$0xf]
    %v247 = vld [vmem:[#allocation5 + $0xac] sm:$0xf]
    %v248 = vld [vmem:[#allocation5 + $0xb0] sm:$0xf]
    %v249 = vld [vmem:[#allocation5 + $0xb4] sm:$0xf]
    %v250 = vld [vmem:[#allocation5 + $0xb8] sm:$0xf]
    %v251 = vld [vmem:[#allocation5 + $0xbc] sm:$0xf]
    %v252 = vld [vmem:[#allocation5 + $0xc0] sm:$0xf]
    %v253 = vld [vmem:[#allocation5 + $0xc4] sm:$0xf]
    %v254 = vld [vmem:[#allocation5 + $0xc8] sm:$0xf]
    %v255 = vld [vmem:[#allocation5 + $0xcc] sm:$0xf]
    %v256 = vld [vmem:[#allocation5 + $0xd0] sm:$0xf]
    %v257 = vld [vmem:[#allocation5 + $0xd4] sm:$0xf]
    %v258 = vld [vmem:[#allocation5 + $0xd8] sm:$0xf]
    %v259 = vld [vmem:[#allocation5 + $0xdc] sm:$0xf]
    %v260 = vld [vmem:[#allocation5 + $0xe0] sm:$0xf]
    %v261 = vld [vmem:[#allocation5 + $0xe4] sm:$0xf]
    %v262 = vld [vmem:[#allocation5 + $0xe8] sm:$0xf]
    %v263 = vld [vmem:[#allocation5 + $0xec] sm:$0xf]
    %v264 = vld [vmem:[#allocation5 + $0xf0] sm:$0xf]
    %v265 = vld [vmem:[#allocation5 + $0xf4] sm:$0xf]
    %v266 = vld [vmem:[#allocation5 + $0xf8] sm:$0xf]
    %v267 = vld [vmem:[#allocation5 + $0xfc] sm:$0xf]
    %v268 = vld [vmem:[#allocation5 + $0x100] sm:$0xf]
    %v269 = vld [vmem:[#allocation5 + $0x104] sm:$0xf]
    %v270 = vld [vmem:[#allocation5 + $0x108] sm:$0xf]
    %v271 = vld [vmem:[#allocation5 + $0x10c] sm:$0xf]
    %v272 = vld [vmem:[#allocation5 + $0x110] sm:$0xf]
    %v273 = vld [vmem:[#allocation5 + $0x114] sm:$0xf]
    %v274 = vld [vmem:[#allocation5 + $0x118] sm:$0xf]
    %v275 = vld [vmem:[#allocation5 + $0x11c] sm:$0xf]
    %v276 = vld [vmem:[#allocation5 + $0x120] sm:$0xf]
    %v277 = vld [vmem:[#allocation5 + $0x124] sm:$0xf]
    %v278 = vld [vmem:[#allocation5 + $0x128] sm:$0xf]
    %v279 = vld [vmem:[#allocation5 + $0x12c] sm:$0xf]
    %v280 = vld [vmem:[#allocation5 + $0x130] sm:$0xf]
    %v281 = vld [vmem:[#allocation5 + $0x134] sm:$0xf]
    %v282 = vld [vmem:[#allocation5 + $0x138] sm:$0xf]
    %v283 = vld [vmem:[#allocation5 + $0x13c] sm:$0xf]
    %v284 = vld [vmem:[#allocation5 + $0x140] sm:$0xf]
    %v285 = vld [vmem:[#allocation5 + $0x144] sm:$0xf]
    %v286 = vld [vmem:[#allocation5 + $0x148] sm:$0xf]
    %v287 = vld [vmem:[#allocation5 + $0x14c] sm:$0xf]
    %v288 = vld [vmem:[#allocation5 + $0x150] sm:$0xf]
    %v289 = vld [vmem:[#allocation5 + $0x154] sm:$0xf]
    %v290 = vld [vmem:[#allocation5 + $0x158] sm:$0xf]
    %v291 = vld [vmem:[#allocation5 + $0x15c] sm:$0xf]
    %v292 = vld [vmem:[#allocation5 + $0x160] sm:$0xf]
    %v293 = vld [vmem:[#allocation5 + $0x164] sm:$0xf]
    %v294 = vld [vmem:[#allocation5 + $0x168] sm:$0xf]
    %v295 = vld [vmem:[#allocation5 + $0x16c] sm:$0xf]
    %v296 = vld [vmem:[#allocation5 + $0x170] sm:$0xf]
    %v297 = vld [vmem:[#allocation5 + $0x174] sm:$0xf]
    %v298 = vld [vmem:[#allocation5 + $0x178] sm:$0xf]
    %v299 = vld [vmem:[#allocation5 + $0x17c] sm:$0xf]
    %v300 = vld [vmem:[#allocation5 + $0x180] sm:$0xf]
    %v301 = vld [vmem:[#allocation5 + $0x184] sm:$0xf]
    %v302 = vld [vmem:[#allocation5 + $0x188] sm:$0xf]
    %v303 = vld [vmem:[#allocation5 + $0x18c] sm:$0xf]
    %v304 = vld [vmem:[#allocation5 + $0x190] sm:$0xf]
    %v305 = vld [vmem:[#allocation5 + $0x194] sm:$0xf]
    %v306 = vld [vmem:[#allocation5 + $0x198] sm:$0xf]
    %v307 = vld [vmem:[#allocation5 + $0x19c] sm:$0xf]
    %v308 = vld [vmem:[#allocation5 + $0x1a0] sm:$0xf]
    %v309 = vld [vmem:[#allocation5 + $0x1a4] sm:$0xf]
    %v310 = vld [vmem:[#allocation5 + $0x1a8] sm:$0xf]
    %v311 = vld [vmem:[#allocation5 + $0x1ac] sm:$0xf]
    %v312 = vld [vmem:[#allocation5 + $0x1b0] sm:$0xf]
    %v313 = vld [vmem:[#allocation5 + $0x1b4] sm:$0xf]
    %v314 = vld [vmem:[#allocation5 + $0x1b8] sm:$0xf]
    %v315 = vld [vmem:[#allocation5 + $0x1bc] sm:$0xf]
    %v316 = vld [vmem:[#allocation5 + $0x1c0] sm:$0xf]
    %v317 = vld [vmem:[#allocation5 + $0x1c4] sm:$0xf]
    %v318 = vld [vmem:[#allocation5 + $0x1c8] sm:$0xf]
    %v319 = vld [vmem:[#allocation5 + $0x1cc] sm:$0xf]
    %v320 = vld [vmem:[#allocation5 + $0x1d0] sm:$0xf]
    %v321 = vld [vmem:[#allocation5 + $0x1d4] sm:$0xf]
    %v322 = vld [vmem:[#allocation5 + $0x1d8] sm:$0xf]
    %v323 = vld [vmem:[#allocation5 + $0x1dc] sm:$0xf]
    %v324 = vld [vmem:[#allocation5 + $0x1e0] sm:$0xf]
    %v325 = vld [vmem:[#allocation5 + $0x1e4] sm:$0xf]
    %v326 = vld [vmem:[#allocation5 + $0x1e8] sm:$0xf]
    %v327 = vld [vmem:[#allocation5 + $0x1ec] sm:$0xf]
    %v328 = vld [vmem:[#allocation5 + $0x1f0] sm:$0xf]
    %v329 = vld [vmem:[#allocation5 + $0x1f4] sm:$0xf]
    %v330 = vld [vmem:[#allocation5 + $0x1f8] sm:$0xf]
    %v331 = vld [vmem:[#allocation5 + $0x1fc] sm:$0xf]
    %v332 = vld [vmem:[#allocation5 + $0x200] sm:$0xf]
    %v333 = vld [vmem:[#allocation5 + $0x204] sm:$0xf]
    %v334 = vld [vmem:[#allocation5 + $0x208] sm:$0xf]
    %v335 = vld [vmem:[#allocation5 + $0x20c] sm:$0xf]
    %v336 = vld [vmem:[#allocation5 + $0x210] sm:$0xf]
    %v337 = vld [vmem:[#allocation5 + $0x214] sm:$0xf]
    %v338 = vld [vmem:[#allocation5 + $0x218] sm:$0xf]
    %v339 = vld [vmem:[#allocation5 + $0x21c] sm:$0xf]
    %v340 = vld [vmem:[#allocation5 + $0x220] sm:$0xf]
    %v341 = vld [vmem:[#allocation5 + $0x224] sm:$0xf]
    %v342 = vld [vmem:[#allocation5 + $0x228] sm:$0xf]
    %v343 = vld [vmem:[#allocation5 + $0x22c] sm:$0xf]
    %v344 = vld [vmem:[#allocation5 + $0x230] sm:$0xf]
    %v345 = vld [vmem:[#allocation5 + $0x234] sm:$0xf]
    %v346 = vld [vmem:[#allocation5 + $0x238] sm:$0xf]
    %v347 = vld [vmem:[#allocation5 + $0x23c] sm:$0xf]
    %v348 = vld [vmem:[#allocation5 + $0x240] sm:$0xf]
    %v349 = vld [vmem:[#allocation5 + $0x244] sm:$0xf]
    %v350 = vld [vmem:[#allocation5 + $0x248] sm:$0xf]
    %v351 = vld [vmem:[#allocation5 + $0x24c] sm:$0xf]
    %v352 = vld [vmem:[#allocation5 + $0x250] sm:$0xf]
    %v353 = vld [vmem:[#allocation5 + $0x254] sm:$0xf]
    %v354 = vld [vmem:[#allocation5 + $0x258] sm:$0xf]
    %v355 = vld [vmem:[#allocation5 + $0x25c] sm:$0xf]
    %v356 = vld [vmem:[#allocation5 + $0x260] sm:$0xf]
    %v357 = vld [vmem:[#allocation5 + $0x264] sm:$0xf]
    %v358 = vld [vmem:[#allocation5 + $0x268] sm:$0xf]
    %v359 = vld [vmem:[#allocation5 + $0x26c] sm:$0xf]
    %v360 = vld [vmem:[#allocation5 + $0x270] sm:$0xf]
    %v361 = vld [vmem:[#allocation5 + $0x274] sm:$0xf]
    %v362 = vld [vmem:[#allocation5 + $0x278] sm:$0xf]
    %v363 = vld [vmem:[#allocation5 + $0x27c] sm:$0xf]
    %v364 = vld [vmem:[#allocation5 + $0x280] sm:$0xf]
    %v365 = vld [vmem:[#allocation5 + $0x284] sm:$0xf]
    %v366 = vld [vmem:[#allocation5 + $0x288] sm:$0xf]
    %v367 = vld [vmem:[#allocation5 + $0x28c] sm:$0xf]
    %v368 = vld [vmem:[#allocation5 + $0x290] sm:$0xf]
    %v369 = vld [vmem:[#allocation5 + $0x294] sm:$0xf]
    %v370 = vld [vmem:[#allocation5 + $0x298] sm:$0xf]
    %v371 = vld [vmem:[#allocation5 + $0x29c] sm:$0xf]
    %v372 = vld [vmem:[#allocation5 + $0x2a0] sm:$0xf]
    %v373 = vld [vmem:[#allocation5 + $0x2a4] sm:$0xf]
    %v374 = vld [vmem:[#allocation5 + $0x2a8] sm:$0xf]
    %v375 = vld [vmem:[#allocation5 + $0x2ac] sm:$0xf]
    %v376 = vld [vmem:[#allocation5 + $0x2b0] sm:$0xf]
    %v377 = vld [vmem:[#allocation5 + $0x2b4] sm:$0xf]
    %v378 = vld [vmem:[#allocation5 + $0x2b8] sm:$0xf]
    %v379 = vld [vmem:[#allocation5 + $0x2bc] sm:$0xf]
    %v380 = vld [vmem:[#allocation5 + $0x2c0] sm:$0xf]
    %v381 = vld [vmem:[#allocation5 + $0x2c4] sm:$0xf]
    %v382 = vld [vmem:[#allocation5 + $0x2c8] sm:$0xf]
    %v383 = vld [vmem:[#allocation5 + $0x2cc] sm:$0xf]
    %v384 = vld [vmem:[#allocation5 + $0x2d0] sm:$0xf]
    %v385 = vld [vmem:[#allocation5 + $0x2d4] sm:$0xf]
    %v386 = vld [vmem:[#allocation5 + $0x2d8] sm:$0xf]
    %v387 = vld [vmem:[#allocation5 + $0x2dc] sm:$0xf]
    %v388 = vld [vmem:[#allocation5 + $0x2e0] sm:$0xf]
    %v389 = vld [vmem:[#allocation5 + $0x2e4] sm:$0xf]
    %v390 = vld [vmem:[#allocation5 + $0x2e8] sm:$0xf]
    %v391 = vld [vmem:[#allocation5 + $0x2ec] sm:$0xf]
    %v392 = vld [vmem:[#allocation5 + $0x2f0] sm:$0xf]
    %v393 = vld [vmem:[#allocation5 + $0x2f4] sm:$0xf]
    %v394 = vld [vmem:[#allocation5 + $0x2f8] sm:$0xf]
    %v395 = vld [vmem:[#allocation5 + $0x2fc] sm:$0xf]
    %v396 = vld [vmem:[#allocation5 + $0x300] sm:$0xf]
    %v397 = vld [vmem:[#allocation5 + $0x304] sm:$0xf]
    %v398 = vld [vmem:[#allocation5 + $0x308] sm:$0xf]
    %v399 = vld [vmem:[#allocation5 + $0x30c] sm:$0xf]
    %v400 = vld [vmem:[#allocation5 + $0x310] sm:$0xf]
    %v401 = vld [vmem:[#allocation5 + $0x314] sm:$0xf]
    %v402 = vld [vmem:[#allocation5 + $0x318] sm:$0xf]
    %v403 = vld [vmem:[#allocation5 + $0x31c] sm:$0xf]
    %v404 = vld [vmem:[#allocation5 + $0x320] sm:$0xf]
    %v405 = vld [vmem:[#allocation5 + $0x324] sm:$0xf]
    %v406 = vld [vmem:[#allocation5 + $0x328] sm:$0xf]
    %v407 = vld [vmem:[#allocation5 + $0x32c] sm:$0xf]
    %v408 = vld [vmem:[#allocation5 + $0x330] sm:$0xf]
    %v409 = vld [vmem:[#allocation5 + $0x334] sm:$0xf]
    %v410 = vld [vmem:[#allocation5 + $0x338] sm:$0xf]
    %v411 = vld [vmem:[#allocation5 + $0x33c] sm:$0xf]
    %v412 = vld [vmem:[#allocation5 + $0x340] sm:$0xf]
    %v413 = vld [vmem:[#allocation5 + $0x344] sm:$0xf]
    %v414 = vld [vmem:[#allocation5 + $0x348] sm:$0xf]
    %v415 = vld [vmem:[#allocation5 + $0x34c] sm:$0xf]
    %v416 = vld [vmem:[#allocation5 + $0x350] sm:$0xf]
    %v417 = vld [vmem:[#allocation5 + $0x354] sm:$0xf]
    %v418 = vld [vmem:[#allocation5 + $0x358] sm:$0xf]
    %v419 = vld [vmem:[#allocation5 + $0x35c] sm:$0xf]
    %v420 = vld [vmem:[#allocation5 + $0x360] sm:$0xf]
    %v421 = vld [vmem:[#allocation5 + $0x364] sm:$0xf]
    %v422 = vld [vmem:[#allocation5 + $0x368] sm:$0xf]
    %v423 = vld [vmem:[#allocation5 + $0x36c] sm:$0xf]
    %v424 = vld [vmem:[#allocation5 + $0x370] sm:$0xf]
    %v425 = vld [vmem:[#allocation5 + $0x374] sm:$0xf]
    %v426 = vld [vmem:[#allocation5 + $0x378] sm:$0xf]
    %v427 = vld [vmem:[#allocation5 + $0x37c] sm:$0xf]
    %v428 = vld [vmem:[#allocation5 + $0x380] sm:$0xf]
    %v429 = vld [vmem:[#allocation5 + $0x384] sm:$0xf]
    %v430 = vld [vmem:[#allocation5 + $0x388] sm:$0xf]
    %v431 = vld [vmem:[#allocation5 + $0x38c] sm:$0xf]
    %v432 = vld [vmem:[#allocation5 + $0x390] sm:$0xf]
    %v433 = vld [vmem:[#allocation5 + $0x394] sm:$0xf]
    %v434 = vld [vmem:[#allocation5 + $0x398] sm:$0xf]
    %v435 = vld [vmem:[#allocation5 + $0x39c] sm:$0xf]
    %v436 = vld [vmem:[#allocation5 + $0x3a0] sm:$0xf]
    %v437 = vld [vmem:[#allocation5 + $0x3a4] sm:$0xf]
    %v438 = vld [vmem:[#allocation5 + $0x3a8] sm:$0xf]
    %v439 = vld [vmem:[#allocation5 + $0x3ac] sm:$0xf]
    %v440 = vld [vmem:[#allocation5 + $0x3b0] sm:$0xf]
    %v441 = vld [vmem:[#allocation5 + $0x3b4] sm:$0xf]
    %v442 = vld [vmem:[#allocation5 + $0x3b8] sm:$0xf]
    %v443 = vld [vmem:[#allocation5 + $0x3bc] sm:$0xf]
    %v444 = vld [vmem:[#allocation5 + $0x3c0] sm:$0xf]
    %v445 = vld [vmem:[#allocation5 + $0x3c4] sm:$0xf]
    %v446 = vld [vmem:[#allocation5 + $0x3c8] sm:$0xf]
    %v447 = vld [vmem:[#allocation5 + $0x3cc] sm:$0xf]
    %v448 = vld [vmem:[#allocation5 + $0x3d0] sm:$0xf]
    %v449 = vld [vmem:[#allocation5 + $0x3d4] sm:$0xf]
    %v450 = vld [vmem:[#allocation5 + $0x3d8] sm:$0xf]
    %v451 = vld [vmem:[#allocation5 + $0x3dc] sm:$0xf]
    %v452 = vld [vmem:[#allocation5 + $0x3e0] sm:$0xf]
    %v453 = vld [vmem:[#allocation5 + $0x3e4] sm:$0xf]
    %v454 = vld [vmem:[#allocation5 + $0x3e8] sm:$0xf]
    %v455 = vld [vmem:[#allocation5 + $0x3ec] sm:$0xf]
    %v456 = vld [vmem:[#allocation5 + $0x3f0] sm:$0xf]
    %v457 = vld [vmem:[#allocation5 + $0x3f4] sm:$0xf]
    %v458 = vld [vmem:[#allocation5 + $0x3f8] sm:$0xf]
    %v459 = vld [vmem:[#allocation5 + $0x3fc] sm:$0xf]
    %v460 = vld [vmem:[#allocation5 + $0x400] sm:$0xf]
    %v461 = vld [vmem:[#allocation5 + $0x404] sm:$0xf]
    %v462 = vld [vmem:[#allocation5 + $0x408] sm:$0xf]
    %v463 = vld [vmem:[#allocation5 + $0x40c] sm:$0xf]
    %v464 = vld [vmem:[#allocation5 + $0x410] sm:$0xf]
    %v465 = vld [vmem:[#allocation5 + $0x414] sm:$0xf]
    %v466 = vld [vmem:[#allocation5 + $0x418] sm:$0xf]
    %v467 = vld [vmem:[#allocation5 + $0x41c] sm:$0xf]
    %v468 = vld [vmem:[#allocation5 + $0x420] sm:$0xf]
    %v469 = vld [vmem:[#allocation5 + $0x424] sm:$0xf]
    %v470 = vld [vmem:[#allocation5 + $0x428] sm:$0xf]
    %v471 = vld [vmem:[#allocation5 + $0x42c] sm:$0xf]
    %v472 = vld [vmem:[#allocation5 + $0x430] sm:$0xf]
    %v473 = vld [vmem:[#allocation5 + $0x434] sm:$0xf]
    %v474 = vld [vmem:[#allocation5 + $0x438] sm:$0xf]
    %v475 = vld [vmem:[#allocation5 + $0x43c] sm:$0xf]
    %v476 = vld [vmem:[#allocation5 + $0x440] sm:$0xf]
    %v477 = vld [vmem:[#allocation5 + $0x444] sm:$0xf]
    %v478 = vld [vmem:[#allocation5 + $0x448] sm:$0xf]
    %v479 = vld [vmem:[#allocation5 + $0x44c] sm:$0xf]
    %v480 = vld [vmem:[#allocation5 + $0x450] sm:$0xf]
    %v481 = vld [vmem:[#allocation5 + $0x454] sm:$0xf]
    %v482 = vld [vmem:[#allocation5 + $0x458] sm:$0xf]
    %v483 = vld [vmem:[#allocation5 + $0x45c] sm:$0xf]
    %v484 = vld [vmem:[#allocation5 + $0x460] sm:$0xf]
    %v485 = vld [vmem:[#allocation5 + $0x464] sm:$0xf]
    %v486 = vld [vmem:[#allocation5 + $0x468] sm:$0xf]
    %v487 = vld [vmem:[#allocation5 + $0x46c] sm:$0xf]
    %v488 = vld [vmem:[#allocation5 + $0x470] sm:$0xf]
    %v489 = vld [vmem:[#allocation5 + $0x474] sm:$0xf]
    %v490 = vld [vmem:[#allocation5 + $0x478] sm:$0xf]
    %v491 = vld [vmem:[#allocation5 + $0x47c] sm:$0xf]
    %v492 = vld [vmem:[#allocation5 + $0x480] sm:$0xf]
    %v493 = vld [vmem:[#allocation5 + $0x484] sm:$0xf]
    %v494 = vld [vmem:[#allocation5 + $0x488] sm:$0xf]
    %v495 = vld [vmem:[#allocation5 + $0x48c] sm:$0xf]
    %v496 = vld [vmem:[#allocation5 + $0x490] sm:$0xf]
    %v497 = vld [vmem:[#allocation5 + $0x494] sm:$0xf]
    %v498 = vld [vmem:[#allocation5 + $0x498] sm:$0xf]
    %v499 = vld [vmem:[#allocation5 + $0x49c] sm:$0xf]
    %v500 = vld [vmem:[#allocation5 + $0x4a0] sm:$0xf]
    %v501 = vld [vmem:[#allocation5 + $0x4a4] sm:$0xf]
    %v502 = vld [vmem:[#allocation5 + $0x4a8] sm:$0xf]
    %v503 = vld [vmem:[#allocation5 + $0x4ac] sm:$0xf]
    %v504 = vld [vmem:[#allocation5 + $0x4b0] sm:$0xf]
    %v505 = vld [vmem:[#allocation5 + $0x4b4] sm:$0xf]
    %v506 = vld [vmem:[#allocation5 + $0x4b8] sm:$0xf]
    %v507 = vld [vmem:[#allocation5 + $0x4bc] sm:$0xf]
    %v508 = vld [vmem:[#allocation5 + $0x4c0] sm:$0xf]
    %v509 = vld [vmem:[#allocation5 + $0x4c4] sm:$0xf]
    %v510 = vld [vmem:[#allocation5 + $0x4c8] sm:$0xf]
    %v511 = vld [vmem:[#allocation5 + $0x4cc] sm:$0xf]
    %v512 = vld [vmem:[#allocation5 + $0x4d0] sm:$0xf]
    %v513 = vld [vmem:[#allocation5 + $0x4d4] sm:$0xf]
    %v514 = vld [vmem:[#allocation5 + $0x4d8] sm:$0xf]
    %v515 = vld [vmem:[#allocation5 + $0x4dc] sm:$0xf]
    %v516 = vld [vmem:[#allocation5 + $0x4e0] sm:$0xf]
    %v517 = vld [vmem:[#allocation5 + $0x4e4] sm:$0xf]
    %v518 = vld [vmem:[#allocation5 + $0x4e8] sm:$0xf]
    %v519 = vld [vmem:[#allocation5 + $0x4ec] sm:$0xf]
    %v520 = vld [vmem:[#allocation5 + $0x4f0] sm:$0xf]
    %v521 = vld [vmem:[#allocation5 + $0x4f4] sm:$0xf]
    %v522 = vld [vmem:[#allocation5 + $0x4f8] sm:$0xf]
    %v523 = vld [vmem:[#allocation5 + $0x4fc] sm:$0xf]
    %v524 = vld [vmem:[#allocation5 + $0x500] sm:$0xf]
    %v525 = vld [vmem:[#allocation5 + $0x504] sm:$0xf]
    %v526 = vld [vmem:[#allocation5 + $0x508] sm:$0xf]
    %v527 = vld [vmem:[#allocation5 + $0x50c] sm:$0xf]
    %v528 = vld [vmem:[#allocation5 + $0x510] sm:$0xf]
    %v529 = vld [vmem:[#allocation5 + $0x514] sm:$0xf]
    %v530 = vld [vmem:[#allocation5 + $0x518] sm:$0xf]
    %v531 = vld [vmem:[#allocation5 + $0x51c] sm:$0xf]
    %v532 = vld [vmem:[#allocation5 + $0x520] sm:$0xf]
    %v533 = vld [vmem:[#allocation5 + $0x524] sm:$0xf]
    %v534 = vld [vmem:[#allocation5 + $0x528] sm:$0xf]
    %v535 = vld [vmem:[#allocation5 + $0x52c] sm:$0xf]
    %v536 = vld [vmem:[#allocation5 + $0x530] sm:$0xf]
    %v537 = vld [vmem:[#allocation5 + $0x534] sm:$0xf]
    %v538 = vld [vmem:[#allocation5 + $0x538] sm:$0xf]
    %v539 = vld [vmem:[#allocation5 + $0x53c] sm:$0xf]
    %v540 = vld [vmem:[#allocation5 + $0x540] sm:$0xf]
    %v541 = vld [vmem:[#allocation5 + $0x544] sm:$0xf]
    %v542 = vld [vmem:[#allocation5 + $0x548] sm:$0xf]
    %v543 = vld [vmem:[#allocation5 + $0x54c] sm:$0xf]
    %v544 = vld [vmem:[#allocation5 + $0x550] sm:$0xf]
    %v545 = vld [vmem:[#allocation5 + $0x554] sm:$0xf]
    %v546 = vld [vmem:[#allocation5 + $0x558] sm:$0xf]
    %v547 = vld [vmem:[#allocation5 + $0x55c] sm:$0xf]
    %v548 = vld [vmem:[#allocation5 + $0x560] sm:$0xf]
    %v549 = vld [vmem:[#allocation5 + $0x564] sm:$0xf]
    %v550 = vld [vmem:[#allocation5 + $0x568] sm:$0xf]
    %v551 = vld [vmem:[#allocation5 + $0x56c] sm:$0xf]
    %v552 = vld [vmem:[#allocation5 + $0x570] sm:$0xf]
    %v553 = vld [vmem:[#allocation5 + $0x574] sm:$0xf]
    %v554 = vld [vmem:[#allocation5 + $0x578] sm:$0xf]
    %v555 = vld [vmem:[#allocation5 + $0x57c] sm:$0xf]
    %v556 = vld [vmem:[#allocation5 + $0x580] sm:$0xf]
    %v557 = vld [vmem:[#allocation5 + $0x584] sm:$0xf]
    %v558 = vld [vmem:[#allocation5 + $0x588] sm:$0xf]
    %v559 = vld [vmem:[#allocation5 + $0x58c] sm:$0xf]
    %v560 = vld [vmem:[#allocation5 + $0x590] sm:$0xf]
    %v561 = vld [vmem:[#allocation5 + $0x594] sm:$0xf]
    %v562 = vld [vmem:[#allocation5 + $0x598] sm:$0xf]
    %v563 = vld [vmem:[#allocation5 + $0x59c] sm:$0xf]
    %v564 = vld [vmem:[#allocation5 + $0x5a0] sm:$0xf]
    %v565 = vld [vmem:[#allocation5 + $0x5a4] sm:$0xf]
    %v566 = vld [vmem:[#allocation5 + $0x5a8] sm:$0xf]
    %v567 = vld [vmem:[#allocation5 + $0x5ac] sm:$0xf]
    %v568 = vld [vmem:[#allocation5 + $0x5b0] sm:$0xf]
    %v569 = vld [vmem:[#allocation5 + $0x5b4] sm:$0xf]
    %v570 = vld [vmem:[#allocation5 + $0x5b8] sm:$0xf]
    %v571 = vld [vmem:[#allocation5 + $0x5bc] sm:$0xf]
    %v572 = vld [vmem:[#allocation5 + $0x5c0] sm:$0xf]
    %v573 = vld [vmem:[#allocation5 + $0x5c4] sm:$0xf]
    %v574 = vld [vmem:[#allocation5 + $0x5c8] sm:$0xf]
    %v575 = vld [vmem:[#allocation5 + $0x5cc] sm:$0xf]
    %v576 = vld [vmem:[#allocation5 + $0x5d0] sm:$0xf]
    %v577 = vld [vmem:[#allocation5 + $0x5d4] sm:$0xf]
    %v578 = vld [vmem:[#allocation5 + $0x5d8] sm:$0xf]
    %v579 = vld [vmem:[#allocation5 + $0x5dc] sm:$0xf]
    %v580 = vld [vmem:[#allocation5 + $0x5e0] sm:$0xf]
    %v581 = vld [vmem:[#allocation5 + $0x5e4] sm:$0xf]
    %v582 = vld [vmem:[#allocation5 + $0x5e8] sm:$0xf]
    %v583 = vld [vmem:[#allocation5 + $0x5ec] sm:$0xf]
    %v584 = vld [vmem:[#allocation5 + $0x5f0] sm:$0xf]
    %v585 = vld [vmem:[#allocation5 + $0x5f4] sm:$0xf]
    %v586 = vld [vmem:[#allocation5 + $0x5f8] sm:$0xf]
    %v587 = vld [vmem:[#allocation5 + $0x5fc] sm:$0xf]
    %v588 = vld [vmem:[%s2] sm:$0x1]
    %v590 = vlaneseq
    %v591 = vshrl.u32 %v590, 7
    %v592 = vsub.s32 0, %v591
    %v593 = vrot.slane %v588, %v592
    %v979 = vunpack.c.l.b16 %v204
    %v980 = vunpack.c.l.b16 %v205
    %v981 = vunpack.c.l.b16 %v206
    %v982 = vunpack.c.l.b16 %v207
    %v983 = vunpack.c.l.b16 %v208
    %v984 = vunpack.c.l.b16 %v209
    %v985 = vunpack.c.l.b16 %v210
    %v986 = vunpack.c.l.b16 %v211
    %v987 = vunpack.c.l.b16 %v212
    %v988 = vunpack.c.l.b16 %v213
    %v989 = vunpack.c.l.b16 %v214
    %v990 = vunpack.c.l.b16 %v215
    %v991 = vunpack.c.l.b16 %v216
    %v992 = vunpack.c.l.b16 %v217
    %v993 = vunpack.c.l.b16 %v218
    %v994 = vunpack.c.l.b16 %v219
    %v995 = vunpack.c.l.b16 %v220
    %v996 = vunpack.c.l.b16 %v221
    %v997 = vunpack.c.l.b16 %v222
    %v998 = vunpack.c.l.b16 %v223
    %v999 = vunpack.c.l.b16 %v224
    %v1000 = vunpack.c.l.b16 %v225
    %v1001 = vunpack.c.l.b16 %v226
    %v1002 = vunpack.c.l.b16 %v227
    %v1003 = vunpack.c.l.b16 %v228
    %v1004 = vunpack.c.l.b16 %v229
    %v1005 = vunpack.c.l.b16 %v230
    %v1006 = vunpack.c.l.b16 %v231
    %v1007 = vunpack.c.l.b16 %v232
    %v1008 = vunpack.c.l.b16 %v233
    %v1009 = vunpack.c.l.b16 %v234
    %v1010 = vunpack.c.l.b16 %v235
    %v1011 = vunpack.c.l.b16 %v236
    %v1012 = vunpack.c.l.b16 %v237
    %v1013 = vunpack.c.l.b16 %v238
    %v1014 = vunpack.c.l.b16 %v239
    %v1015 = vunpack.c.l.b16 %v240
    %v1016 = vunpack.c.l.b16 %v241
    %v1017 = vunpack.c.l.b16 %v242
    %v1018 = vunpack.c.l.b16 %v243
    %v1019 = vunpack.c.l.b16 %v244
    %v1020 = vunpack.c.l.b16 %v245
    %v1021 = vunpack.c.l.b16 %v246
    %v1022 = vunpack.c.l.b16 %v247
    %v1023 = vunpack.c.l.b16 %v248
    %v1024 = vunpack.c.l.b16 %v249
    %v1025 = vunpack.c.l.b16 %v250
    %v1026 = vunpack.c.l.b16 %v251
    %v1027 = vunpack.c.l.b16 %v252
    %v1028 = vunpack.c.l.b16 %v253
    %v1029 = vunpack.c.l.b16 %v254
    %v1030 = vunpack.c.l.b16 %v255
    %v1031 = vunpack.c.l.b16 %v256
    %v1032 = vunpack.c.l.b16 %v257
    %v1033 = vunpack.c.l.b16 %v258
    %v1034 = vunpack.c.l.b16 %v259
    %v1035 = vunpack.c.l.b16 %v260
    %v1036 = vunpack.c.l.b16 %v261
    %v1037 = vunpack.c.l.b16 %v262
    %v1038 = vunpack.c.l.b16 %v263
    %v1039 = vunpack.c.l.b16 %v264
    %v1040 = vunpack.c.l.b16 %v265
    %v1041 = vunpack.c.l.b16 %v266
    %v1042 = vunpack.c.l.b16 %v267
    %v1043 = vunpack.c.l.b16 %v268
    %v1044 = vunpack.c.l.b16 %v269
    %v1045 = vunpack.c.l.b16 %v270
    %v1046 = vunpack.c.l.b16 %v271
    %v1047 = vunpack.c.l.b16 %v272
    %v1048 = vunpack.c.l.b16 %v273
    %v1049 = vunpack.c.l.b16 %v274
    %v1050 = vunpack.c.l.b16 %v275
    %v1051 = vunpack.c.l.b16 %v276
    %v1052 = vunpack.c.l.b16 %v277
    %v1053 = vunpack.c.l.b16 %v278
    %v1054 = vunpack.c.l.b16 %v279
    %v1055 = vunpack.c.l.b16 %v280
    %v1056 = vunpack.c.l.b16 %v281
    %v1057 = vunpack.c.l.b16 %v282
    %v1058 = vunpack.c.l.b16 %v283
    %v1059 = vunpack.c.l.b16 %v284
    %v1060 = vunpack.c.l.b16 %v285
    %v1061 = vunpack.c.l.b16 %v286
    %v1062 = vunpack.c.l.b16 %v287
    %v1063 = vunpack.c.l.b16 %v288
    %v1064 = vunpack.c.l.b16 %v289
    %v1065 = vunpack.c.l.b16 %v290
    %v1066 = vunpack.c.l.b16 %v291
    %v1067 = vunpack.c.l.b16 %v292
    %v1068 = vunpack.c.l.b16 %v293
    %v1069 = vunpack.c.l.b16 %v294
    %v1070 = vunpack.c.l.b16 %v295
    %v1071 = vunpack.c.l.b16 %v296
    %v1072 = vunpack.c.l.b16 %v297
    %v1073 = vunpack.c.l.b16 %v298
    %v1074 = vunpack.c.l.b16 %v299
    %v1075 = vunpack.c.l.b16 %v300
    %v1076 = vunpack.c.l.b16 %v301
    %v1077 = vunpack.c.l.b16 %v302
    %v1078 = vunpack.c.l.b16 %v303
    %v1079 = vunpack.c.l.b16 %v304
    %v1080 = vunpack.c.l.b16 %v305
    %v1081 = vunpack.c.l.b16 %v306
    %v1082 = vunpack.c.l.b16 %v307
    %v1083 = vunpack.c.l.b16 %v308
    %v1084 = vunpack.c.l.b16 %v309
    %v1085 = vunpack.c.l.b16 %v310
    %v1086 = vunpack.c.l.b16 %v311
    %v1087 = vunpack.c.l.b16 %v312
    %v1088 = vunpack.c.l.b16 %v313
    %v1089 = vunpack.c.l.b16 %v314
    %v1090 = vunpack.c.l.b16 %v315
    %v1091 = vunpack.c.l.b16 %v316
    %v1092 = vunpack.c.l.b16 %v317
    %v1093 = vunpack.c.l.b16 %v318
    %v1094 = vunpack.c.l.b16 %v319
    %v1095 = vunpack.c.l.b16 %v320
    %v1096 = vunpack.c.l.b16 %v321
    %v1097 = vunpack.c.l.b16 %v322
    %v1098 = vunpack.c.l.b16 %v323
    %v1099 = vunpack.c.l.b16 %v324
    %v1100 = vunpack.c.l.b16 %v325
    %v1101 = vunpack.c.l.b16 %v326
    %v1102 = vunpack.c.l.b16 %v327
    %v1103 = vunpack.c.l.b16 %v328
    %v1104 = vunpack.c.l.b16 %v329
    %v1105 = vunpack.c.l.b16 %v330
    %v1106 = vunpack.c.l.b16 %v331
    %v1107 = vunpack.c.l.b16 %v332
    %v1108 = vunpack.c.l.b16 %v333
    %v1109 = vunpack.c.l.b16 %v334
    %v1110 = vunpack.c.l.b16 %v335
    %v1111 = vunpack.c.l.b16 %v336
    %v1112 = vunpack.c.l.b16 %v337
    %v1113 = vunpack.c.l.b16 %v338
    %v1114 = vunpack.c.l.b16 %v339
    %v1115 = vunpack.c.l.b16 %v340
    %v1116 = vunpack.c.l.b16 %v341
    %v1117 = vunpack.c.l.b16 %v342
    %v1118 = vunpack.c.l.b16 %v343
    %v1119 = vunpack.c.l.b16 %v344
    %v1120 = vunpack.c.l.b16 %v345
    %v1121 = vunpack.c.l.b16 %v346
    %v1122 = vunpack.c.l.b16 %v347
    %v1123 = vunpack.c.l.b16 %v348
    %v1124 = vunpack.c.l.b16 %v349
    %v1125 = vunpack.c.l.b16 %v350
    %v1126 = vunpack.c.l.b16 %v351
    %v1127 = vunpack.c.l.b16 %v352
    %v1128 = vunpack.c.l.b16 %v353
    %v1129 = vunpack.c.l.b16 %v354
    %v1130 = vunpack.c.l.b16 %v355
    %v1131 = vunpack.c.l.b16 %v356
    %v1132 = vunpack.c.l.b16 %v357
    %v1133 = vunpack.c.l.b16 %v358
    %v1134 = vunpack.c.l.b16 %v359
    %v1135 = vunpack.c.l.b16 %v360
    %v1136 = vunpack.c.l.b16 %v361
    %v1137 = vunpack.c.l.b16 %v362
    %v1138 = vunpack.c.l.b16 %v363
    %v1139 = vunpack.c.l.b16 %v364
    %v1140 = vunpack.c.l.b16 %v365
    %v1141 = vunpack.c.l.b16 %v366
    %v1142 = vunpack.c.l.b16 %v367
    %v1143 = vunpack.c.l.b16 %v368
    %v1144 = vunpack.c.l.b16 %v369
    %v1145 = vunpack.c.l.b16 %v370
    %v1146 = vunpack.c.l.b16 %v371
    %v1147 = vunpack.c.l.b16 %v372
    %v1148 = vunpack.c.l.b16 %v373
    %v1149 = vunpack.c.l.b16 %v374
    %v1150 = vunpack.c.l.b16 %v375
    %v1151 = vunpack.c.l.b16 %v376
    %v1152 = vunpack.c.l.b16 %v377
    %v1153 = vunpack.c.l.b16 %v378
    %v1154 = vunpack.c.l.b16 %v379
    %v1155 = vunpack.c.l.b16 %v380
    %v1156 = vunpack.c.l.b16 %v381
    %v1157 = vunpack.c.l.b16 %v382
    %v1158 = vunpack.c.l.b16 %v383
    %v1159 = vunpack.c.l.b16 %v384
    %v1160 = vunpack.c.l.b16 %v385
    %v1161 = vunpack.c.l.b16 %v386
    %v1162 = vunpack.c.l.b16 %v387
    %v1163 = vunpack.c.l.b16 %v388
    %v1164 = vunpack.c.l.b16 %v389
    %v1165 = vunpack.c.l.b16 %v390
    %v1166 = vunpack.c.l.b16 %v391
    %v1167 = vunpack.c.l.b16 %v392
    %v1168 = vunpack.c.l.b16 %v393
    %v1169 = vunpack.c.l.b16 %v394
    %v1170 = vunpack.c.l.b16 %v395
    %v1171 = vunpack.c.l.b16 %v396
    %v1172 = vunpack.c.l.b16 %v397
    %v1173 = vunpack.c.l.b16 %v398
    %v1174 = vunpack.c.l.b16 %v399
    %v1175 = vunpack.c.l.b16 %v400
    %v1176 = vunpack.c.l.b16 %v401
    %v1177 = vunpack.c.l.b16 %v402
    %v1178 = vunpack.c.l.b16 %v403
    %v1179 = vunpack.c.l.b16 %v404
    %v1180 = vunpack.c.l.b16 %v405
    %v1181 = vunpack.c.l.b16 %v406
    %v1182 = vunpack.c.l.b16 %v407
    %v1183 = vunpack.c.l.b16 %v408
    %v1184 = vunpack.c.l.b16 %v409
    %v1185 = vunpack.c.l.b16 %v410
    %v1186 = vunpack.c.l.b16 %v411
    %v1187 = vunpack.c.l.b16 %v412
    %v1188 = vunpack.c.l.b16 %v413
    %v1189 = vunpack.c.l.b16 %v414
    %v1190 = vunpack.c.l.b16 %v415
    %v1191 = vunpack.c.l.b16 %v416
    %v1192 = vunpack.c.l.b16 %v417
    %v1193 = vunpack.c.l.b16 %v418
    %v1194 = vunpack.c.l.b16 %v419
    %v1195 = vunpack.c.l.b16 %v420
    %v1196 = vunpack.c.l.b16 %v421
    %v1197 = vunpack.c.l.b16 %v422
    %v1198 = vunpack.c.l.b16 %v423
    %v1199 = vunpack.c.l.b16 %v424
    %v1200 = vunpack.c.l.b16 %v425
    %v1201 = vunpack.c.l.b16 %v426
    %v1202 = vunpack.c.l.b16 %v427
    %v1203 = vunpack.c.l.b16 %v428
    %v1204 = vunpack.c.l.b16 %v429
    %v1205 = vunpack.c.l.b16 %v430
    %v1206 = vunpack.c.l.b16 %v431
    %v1207 = vunpack.c.l.b16 %v432
    %v1208 = vunpack.c.l.b16 %v433
    %v1209 = vunpack.c.l.b16 %v434
    %v1210 = vunpack.c.l.b16 %v435
    %v1211 = vunpack.c.l.b16 %v436
    %v1212 = vunpack.c.l.b16 %v437
    %v1213 = vunpack.c.l.b16 %v438
    %v1214 = vunpack.c.l.b16 %v439
    %v1215 = vunpack.c.l.b16 %v440
    %v1216 = vunpack.c.l.b16 %v441
    %v1217 = vunpack.c.l.b16 %v442
    %v1218 = vunpack.c.l.b16 %v443
    %v1219 = vunpack.c.l.b16 %v444
    %v1220 = vunpack.c.l.b16 %v445
    %v1221 = vunpack.c.l.b16 %v446
    %v1222 = vunpack.c.l.b16 %v447
    %v1223 = vunpack.c.l.b16 %v448
    %v1224 = vunpack.c.l.b16 %v449
    %v1225 = vunpack.c.l.b16 %v450
    %v1226 = vunpack.c.l.b16 %v451
    %v1227 = vunpack.c.l.b16 %v452
    %v1228 = vunpack.c.l.b16 %v453
    %v1229 = vunpack.c.l.b16 %v454
    %v1230 = vunpack.c.l.b16 %v455
    %v1231 = vunpack.c.l.b16 %v456
    %v1232 = vunpack.c.l.b16 %v457
    %v1233 = vunpack.c.l.b16 %v458
    %v1234 = vunpack.c.l.b16 %v459
    %v1235 = vunpack.c.l.b16 %v460
    %v1236 = vunpack.c.l.b16 %v461
    %v1237 = vunpack.c.l.b16 %v462
    %v1238 = vunpack.c.l.b16 %v463
    %v1239 = vunpack.c.l.b16 %v464
    %v1240 = vunpack.c.l.b16 %v465
    %v1241 = vunpack.c.l.b16 %v466
    %v1242 = vunpack.c.l.b16 %v467
    %v1243 = vunpack.c.l.b16 %v468
    %v1244 = vunpack.c.l.b16 %v469
    %v1245 = vunpack.c.l.b16 %v470
    %v1246 = vunpack.c.l.b16 %v471
    %v1247 = vunpack.c.l.b16 %v472
    %v1248 = vunpack.c.l.b16 %v473
    %v1249 = vunpack.c.l.b16 %v474
    %v1250 = vunpack.c.l.b16 %v475
    %v1251 = vunpack.c.l.b16 %v476
    %v1252 = vunpack.c.l.b16 %v477
    %v1253 = vunpack.c.l.b16 %v478
    %v1254 = vunpack.c.l.b16 %v479
    %v1255 = vunpack.c.l.b16 %v480
    %v1256 = vunpack.c.l.b16 %v481
    %v1257 = vunpack.c.l.b16 %v482
    %v1258 = vunpack.c.l.b16 %v483
    %v1259 = vunpack.c.l.b16 %v484
    %v1260 = vunpack.c.l.b16 %v485
    %v1261 = vunpack.c.l.b16 %v486
    %v1262 = vunpack.c.l.b16 %v487
    %v1263 = vunpack.c.l.b16 %v488
    %v1264 = vunpack.c.l.b16 %v489
    %v1265 = vunpack.c.l.b16 %v490
    %v1266 = vunpack.c.l.b16 %v491
    %v1267 = vunpack.c.l.b16 %v492
    %v1268 = vunpack.c.l.b16 %v493
    %v1269 = vunpack.c.l.b16 %v494
    %v1270 = vunpack.c.l.b16 %v495
    %v1271 = vunpack.c.l.b16 %v496
    %v1272 = vunpack.c.l.b16 %v497
    %v1273 = vunpack.c.l.b16 %v498
    %v1274 = vunpack.c.l.b16 %v499
    %v1275 = vunpack.c.l.b16 %v500
    %v1276 = vunpack.c.l.b16 %v501
    %v1277 = vunpack.c.l.b16 %v502
    %v1278 = vunpack.c.l.b16 %v503
    %v1279 = vunpack.c.l.b16 %v504
    %v1280 = vunpack.c.l.b16 %v505
    %v1281 = vunpack.c.l.b16 %v506
    %v1282 = vunpack.c.l.b16 %v507
    %v1283 = vunpack.c.l.b16 %v508
    %v1284 = vunpack.c.l.b16 %v509
    %v1285 = vunpack.c.l.b16 %v510
    %v1286 = vunpack.c.l.b16 %v511
    %v1287 = vunpack.c.l.b16 %v512
    %v1288 = vunpack.c.l.b16 %v513
    %v1289 = vunpack.c.l.b16 %v514
    %v1290 = vunpack.c.l.b16 %v515
    %v1291 = vunpack.c.l.b16 %v516
    %v1292 = vunpack.c.l.b16 %v517
    %v1293 = vunpack.c.l.b16 %v518
    %v1294 = vunpack.c.l.b16 %v519
    %v1295 = vunpack.c.l.b16 %v520
    %v1296 = vunpack.c.l.b16 %v521
    %v1297 = vunpack.c.l.b16 %v522
    %v1298 = vunpack.c.l.b16 %v523
    %v1299 = vunpack.c.l.b16 %v524
    %v1300 = vunpack.c.l.b16 %v525
    %v1301 = vunpack.c.l.b16 %v526
    %v1302 = vunpack.c.l.b16 %v527
    %v1303 = vunpack.c.l.b16 %v528
    %v1304 = vunpack.c.l.b16 %v529
    %v1305 = vunpack.c.l.b16 %v530
    %v1306 = vunpack.c.l.b16 %v531
    %v1307 = vunpack.c.l.b16 %v532
    %v1308 = vunpack.c.l.b16 %v533
    %v1309 = vunpack.c.l.b16 %v534
    %v1310 = vunpack.c.l.b16 %v535
    %v1311 = vunpack.c.l.b16 %v536
    %v1312 = vunpack.c.l.b16 %v537
    %v1313 = vunpack.c.l.b16 %v538
    %v1314 = vunpack.c.l.b16 %v539
    %v1315 = vunpack.c.l.b16 %v540
    %v1316 = vunpack.c.l.b16 %v541
    %v1317 = vunpack.c.l.b16 %v542
    %v1318 = vunpack.c.l.b16 %v543
    %v1319 = vunpack.c.l.b16 %v544
    %v1320 = vunpack.c.l.b16 %v545
    %v1321 = vunpack.c.l.b16 %v546
    %v1322 = vunpack.c.l.b16 %v547
    %v1323 = vunpack.c.l.b16 %v548
    %v1324 = vunpack.c.l.b16 %v549
    %v1325 = vunpack.c.l.b16 %v550
    %v1326 = vunpack.c.l.b16 %v551
    %v1327 = vunpack.c.l.b16 %v552
    %v1328 = vunpack.c.l.b16 %v553
    %v1329 = vunpack.c.l.b16 %v554
    %v1330 = vunpack.c.l.b16 %v555
    %v1331 = vunpack.c.l.b16 %v556
    %v1332 = vunpack.c.l.b16 %v557
    %v1333 = vunpack.c.l.b16 %v558
    %v1334 = vunpack.c.l.b16 %v559
    %v1335 = vunpack.c.l.b16 %v560
    %v1336 = vunpack.c.l.b16 %v561
    %v1337 = vunpack.c.l.b16 %v562
    %v1338 = vunpack.c.l.b16 %v563
    %v1339 = vunpack.c.l.b16 %v564
    %v1340 = vunpack.c.l.b16 %v565
    %v1341 = vunpack.c.l.b16 %v566
    %v1342 = vunpack.c.l.b16 %v567
    %v1343 = vunpack.c.l.b16 %v568
    %v1344 = vunpack.c.l.b16 %v569
    %v1345 = vunpack.c.l.b16 %v570
    %v1346 = vunpack.c.l.b16 %v571
    %v1347 = vunpack.c.l.b16 %v572
    %v1348 = vunpack.c.l.b16 %v573
    %v1349 = vunpack.c.l.b16 %v574
    %v1350 = vunpack.c.l.b16 %v575
    %v1351 = vunpack.c.l.b16 %v576
    %v1352 = vunpack.c.l.b16 %v577
    %v1353 = vunpack.c.l.b16 %v578
    %v1354 = vunpack.c.l.b16 %v579
    %v1355 = vunpack.c.l.b16 %v580
    %v1356 = vunpack.c.l.b16 %v581
    %v1357 = vunpack.c.l.b16 %v582
    %v1358 = vunpack.c.l.b16 %v583
    %v1359 = vunpack.c.l.b16 %v584
    %v1360 = vunpack.c.l.b16 %v585
    %v1361 = vunpack.c.l.b16 %v586
    %v1362 = vunpack.c.l.b16 %v587
    %v1363 = vpack.c.b16 %v980, %v979
    %v1364 = vpack.c.b16 %v982, %v981
    %v1365 = vpack.c.b16 %v984, %v983
    %v1366 = vpack.c.b16 %v986, %v985
    %v1367 = vpack.c.b16 %v988, %v987
    %v1368 = vpack.c.b16 %v990, %v989
    %v1369 = vpack.c.b16 %v992, %v991
    %v1370 = vpack.c.b16 %v994, %v993
    %v1371 = vpack.c.b16 %v996, %v995
    %v1372 = vpack.c.b16 %v998, %v997
    %v1373 = vpack.c.b16 %v1000, %v999
    %v1374 = vpack.c.b16 %v1002, %v1001
    %v1375 = vpack.c.b16 %v1004, %v1003
    %v1376 = vpack.c.b16 %v1006, %v1005
    %v1377 = vpack.c.b16 %v1008, %v1007
    %v1378 = vpack.c.b16 %v1010, %v1009
    %v1379 = vpack.c.b16 %v1012, %v1011
    %v1380 = vpack.c.b16 %v1014, %v1013
    %v1381 = vpack.c.b16 %v1016, %v1015
    %v1382 = vpack.c.b16 %v1018, %v1017
    %v1383 = vpack.c.b16 %v1020, %v1019
    %v1384 = vpack.c.b16 %v1022, %v1021
    %v1385 = vpack.c.b16 %v1024, %v1023
    %v1386 = vpack.c.b16 %v1026, %v1025
    %v1387 = vpack.c.b16 %v1028, %v1027
    %v1388 = vpack.c.b16 %v1030, %v1029
    %v1389 = vpack.c.b16 %v1032, %v1031
    %v1390 = vpack.c.b16 %v1034, %v1033
    %v1391 = vpack.c.b16 %v1036, %v1035
    %v1392 = vpack.c.b16 %v1038, %v1037
    %v1393 = vpack.c.b16 %v1040, %v1039
    %v1394 = vpack.c.b16 %v1042, %v1041
    %v1395 = vpack.c.b16 %v1044, %v1043
    %v1396 = vpack.c.b16 %v1046, %v1045
    %v1397 = vpack.c.b16 %v1048, %v1047
    %v1398 = vpack.c.b16 %v1050, %v1049
    %v1399 = vpack.c.b16 %v1052, %v1051
    %v1400 = vpack.c.b16 %v1054, %v1053
    %v1401 = vpack.c.b16 %v1056, %v1055
    %v1402 = vpack.c.b16 %v1058, %v1057
    %v1403 = vpack.c.b16 %v1060, %v1059
    %v1404 = vpack.c.b16 %v1062, %v1061
    %v1405 = vpack.c.b16 %v1064, %v1063
    %v1406 = vpack.c.b16 %v1066, %v1065
    %v1407 = vpack.c.b16 %v1068, %v1067
    %v1408 = vpack.c.b16 %v1070, %v1069
    %v1409 = vpack.c.b16 %v1072, %v1071
    %v1410 = vpack.c.b16 %v1074, %v1073
    %v1411 = vpack.c.b16 %v1076, %v1075
    %v1412 = vpack.c.b16 %v1078, %v1077
    %v1413 = vpack.c.b16 %v1080, %v1079
    %v1414 = vpack.c.b16 %v1082, %v1081
    %v1415 = vpack.c.b16 %v1084, %v1083
    %v1416 = vpack.c.b16 %v1086, %v1085
    %v1417 = vpack.c.b16 %v1088, %v1087
    %v1418 = vpack.c.b16 %v1090, %v1089
    %v1419 = vpack.c.b16 %v1092, %v1091
    %v1420 = vpack.c.b16 %v1094, %v1093
    %v1421 = vpack.c.b16 %v1096, %v1095
    %v1422 = vpack.c.b16 %v1098, %v1097
    %v1423 = vpack.c.b16 %v1100, %v1099
    %v1424 = vpack.c.b16 %v1102, %v1101
    %v1425 = vpack.c.b16 %v1104, %v1103
    %v1426 = vpack.c.b16 %v1106, %v1105
    %v1427 = vpack.c.b16 %v1108, %v1107
    %v1428 = vpack.c.b16 %v1110, %v1109
    %v1429 = vpack.c.b16 %v1112, %v1111
    %v1430 = vpack.c.b16 %v1114, %v1113
    %v1431 = vpack.c.b16 %v1116, %v1115
    %v1432 = vpack.c.b16 %v1118, %v1117
    %v1433 = vpack.c.b16 %v1120, %v1119
    %v1434 = vpack.c.b16 %v1122, %v1121
    %v1435 = vpack.c.b16 %v1124, %v1123
    %v1436 = vpack.c.b16 %v1126, %v1125
    %v1437 = vpack.c.b16 %v1128, %v1127
    %v1438 = vpack.c.b16 %v1130, %v1129
    %v1439 = vpack.c.b16 %v1132, %v1131
    %v1440 = vpack.c.b16 %v1134, %v1133
    %v1441 = vpack.c.b16 %v1136, %v1135
    %v1442 = vpack.c.b16 %v1138, %v1137
    %v1443 = vpack.c.b16 %v1140, %v1139
    %v1444 = vpack.c.b16 %v1142, %v1141
    %v1445 = vpack.c.b16 %v1144, %v1143
    %v1446 = vpack.c.b16 %v1146, %v1145
    %v1447 = vpack.c.b16 %v1148, %v1147
    %v1448 = vpack.c.b16 %v1150, %v1149
    %v1449 = vpack.c.b16 %v1152, %v1151
    %v1450 = vpack.c.b16 %v1154, %v1153
    %v1451 = vpack.c.b16 %v1156, %v1155
    %v1452 = vpack.c.b16 %v1158, %v1157
    %v1453 = vpack.c.b16 %v1160, %v1159
    %v1454 = vpack.c.b16 %v1162, %v1161
    %v1455 = vpack.c.b16 %v1164, %v1163
    %v1456 = vpack.c.b16 %v1166, %v1165
    %v1457 = vpack.c.b16 %v1168, %v1167
    %v1458 = vpack.c.b16 %v1170, %v1169
    %v1459 = vpack.c.b16 %v1172, %v1171
    %v1460 = vpack.c.b16 %v1174, %v1173
    %v1461 = vpack.c.b16 %v1176, %v1175
    %v1462 = vpack.c.b16 %v1178, %v1177
    %v1463 = vpack.c.b16 %v1180, %v1179
    %v1464 = vpack.c.b16 %v1182, %v1181
    %v1465 = vpack.c.b16 %v1184, %v1183
    %v1466 = vpack.c.b16 %v1186, %v1185
    %v1467 = vpack.c.b16 %v1188, %v1187
    %v1468 = vpack.c.b16 %v1190, %v1189
    %v1469 = vpack.c.b16 %v1192, %v1191
    %v1470 = vpack.c.b16 %v1194, %v1193
    %v1471 = vpack.c.b16 %v1196, %v1195
    %v1472 = vpack.c.b16 %v1198, %v1197
    %v1473 = vpack.c.b16 %v1200, %v1199
    %v1474 = vpack.c.b16 %v1202, %v1201
    %v1475 = vpack.c.b16 %v1204, %v1203
    %v1476 = vpack.c.b16 %v1206, %v1205
    %v1477 = vpack.c.b16 %v1208, %v1207
    %v1478 = vpack.c.b16 %v1210, %v1209
    %v1479 = vpack.c.b16 %v1212, %v1211
    %v1480 = vpack.c.b16 %v1214, %v1213
    %v1481 = vpack.c.b16 %v1216, %v1215
    %v1482 = vpack.c.b16 %v1218, %v1217
    %v1483 = vpack.c.b16 %v1220, %v1219
    %v1484 = vpack.c.b16 %v1222, %v1221
    %v1485 = vpack.c.b16 %v1224, %v1223
    %v1486 = vpack.c.b16 %v1226, %v1225
    %v1487 = vpack.c.b16 %v1228, %v1227
    %v1488 = vpack.c.b16 %v1230, %v1229
    %v1489 = vpack.c.b16 %v1232, %v1231
    %v1490 = vpack.c.b16 %v1234, %v1233
    %v1491 = vpack.c.b16 %v1236, %v1235
    %v1492 = vpack.c.b16 %v1238, %v1237
    %v1493 = vpack.c.b16 %v1240, %v1239
    %v1494 = vpack.c.b16 %v1242, %v1241
    %v1495 = vpack.c.b16 %v1244, %v1243
    %v1496 = vpack.c.b16 %v1246, %v1245
    %v1497 = vpack.c.b16 %v1248, %v1247
    %v1498 = vpack.c.b16 %v1250, %v1249
    %v1499 = vpack.c.b16 %v1252, %v1251
    %v1500 = vpack.c.b16 %v1254, %v1253
    %v1501 = vpack.c.b16 %v1256, %v1255
    %v1502 = vpack.c.b16 %v1258, %v1257
    %v1503 = vpack.c.b16 %v1260, %v1259
    %v1504 = vpack.c.b16 %v1262, %v1261
    %v1505 = vpack.c.b16 %v1264, %v1263
    %v1506 = vpack.c.b16 %v1266, %v1265
    %v1507 = vpack.c.b16 %v1268, %v1267
    %v1508 = vpack.c.b16 %v1270, %v1269
    %v1509 = vpack.c.b16 %v1272, %v1271
    %v1510 = vpack.c.b16 %v1274, %v1273
    %v1511 = vpack.c.b16 %v1276, %v1275
    %v1512 = vpack.c.b16 %v1278, %v1277
    %v1513 = vpack.c.b16 %v1280, %v1279
    %v1514 = vpack.c.b16 %v1282, %v1281
    %v1515 = vpack.c.b16 %v1284, %v1283
    %v1516 = vpack.c.b16 %v1286, %v1285
    %v1517 = vpack.c.b16 %v1288, %v1287
    %v1518 = vpack.c.b16 %v1290, %v1289
    %v1519 = vpack.c.b16 %v1292, %v1291
    %v1520 = vpack.c.b16 %v1294, %v1293
    %v1521 = vpack.c.b16 %v1296, %v1295
    %v1522 = vpack.c.b16 %v1298, %v1297
    %v1523 = vpack.c.b16 %v1300, %v1299
    %v1524 = vpack.c.b16 %v1302, %v1301
    %v1525 = vpack.c.b16 %v1304, %v1303
    %v1526 = vpack.c.b16 %v1306, %v1305
    %v1527 = vpack.c.b16 %v1308, %v1307
    %v1528 = vpack.c.b16 %v1310, %v1309
    %v1529 = vpack.c.b16 %v1312, %v1311
    %v1530 = vpack.c.b16 %v1314, %v1313
    %v1531 = vpack.c.b16 %v1316, %v1315
    %v1532 = vpack.c.b16 %v1318, %v1317
    %v1533 = vpack.c.b16 %v1320, %v1319
    %v1534 = vpack.c.b16 %v1322, %v1321
    %v1535 = vpack.c.b16 %v1324, %v1323
    %v1536 = vpack.c.b16 %v1326, %v1325
    %v1537 = vpack.c.b16 %v1328, %v1327
    %v1538 = vpack.c.b16 %v1330, %v1329
    %v1539 = vpack.c.b16 %v1332, %v1331
    %v1540 = vpack.c.b16 %v1334, %v1333
    %v1541 = vpack.c.b16 %v1336, %v1335
    %v1542 = vpack.c.b16 %v1338, %v1337
    %v1543 = vpack.c.b16 %v1340, %v1339
    %v1544 = vpack.c.b16 %v1342, %v1341
    %v1545 = vpack.c.b16 %v1344, %v1343
    %v1546 = vpack.c.b16 %v1346, %v1345
    %v1547 = vpack.c.b16 %v1348, %v1347
    %v1548 = vpack.c.b16 %v1350, %v1349
    %v1549 = vpack.c.b16 %v1352, %v1351
    %v1550 = vpack.c.b16 %v1354, %v1353
    %v1551 = vpack.c.b16 %v1356, %v1355
    %v1552 = vpack.c.b16 %v1358, %v1357
    %v1553 = vpack.c.b16 %v1360, %v1359
    %v1554 = vpack.c.b16 %v1362, %v1361
    %1747 = vmatprep.subr.bf16.mxu0 0
    %1748 = vmatpush1.bf16.msra.mxu0 %v1363
    %1749 = vmatprep.subr.bf16.mxu0 0
    %1750 = vmatpush1.bf16.msra.mxu0 %v1364
    %1751 = vmatprep.subr.bf16.mxu0 0
    %1752 = vmatpush1.bf16.msra.mxu0 %v1365
    %1753 = vmatprep.subr.bf16.mxu0 0
    %1754 = vmatpush1.bf16.msra.mxu0 %v1366
    %1755 = vmatprep.subr.bf16.mxu0 0
    %1756 = vmatpush1.bf16.msra.mxu0 %v1367
    %1757 = vmatprep.subr.bf16.mxu0 0
    %1758 = vmatpush1.bf16.msra.mxu0 %v1368
    %1759 = vmatprep.subr.bf16.mxu0 0
    %1760 = vmatpush1.bf16.msra.mxu0 %v1369
    %1761 = vmatprep.subr.bf16.mxu0 0
    %1762 = vmatpush1.bf16.msra.mxu0 %v1370
    %1763 = vmatprep.subr.bf16.mxu0 0
    %1764 = vmatpush1.bf16.msra.mxu0 %v1371
    %1765 = vmatprep.subr.bf16.mxu0 0
    %1766 = vmatpush1.bf16.msra.mxu0 %v1372
    %1767 = vmatprep.subr.bf16.mxu0 0
    %1768 = vmatpush1.bf16.msra.mxu0 %v1373
    %1769 = vmatprep.subr.bf16.mxu0 0
    %1770 = vmatpush1.bf16.msra.mxu0 %v1374
    %1771 = vmatprep.subr.bf16.mxu0 0
    %1772 = vmatpush1.bf16.msra.mxu0 %v1375
    %1773 = vmatprep.subr.bf16.mxu0 0
    %1774 = vmatpush1.bf16.msra.mxu0 %v1376
    %1775 = vmatprep.subr.bf16.mxu0 0
    %1776 = vmatpush1.bf16.msra.mxu0 %v1377
    %1777 = vmatprep.subr.bf16.mxu0 0
    %1778 = vmatpush1.bf16.msra.mxu0 %v1378
    %1779 = vmatprep.mubr.bf16.mxu0 %v181
    %1780 = vmatmul.mubr.bf16.gmra.mrb[0].mxu0 %v180
    %v1781 = vpop.f32.mrb[0].mxu0
    %v1782 = vadd.f32 %v593, %v1781
    %v1783 = vpop.f32.mrb[0].mxu0
    %v1784 = vpop.f32.mrb[0].mxu0
    %v1785 = vpop.f32.mrb[0].mxu0
    %1786 = vdwg.mxu0
    %1787 = vmatprep.subr.bf16.mxu0 0
    %1788 = vmatpush1.bf16.msra.mxu0 %v1379
    %1789 = vmatprep.subr.bf16.mxu0 0
    %1790 = vmatpush1.bf16.msra.mxu0 %v1380
    %1791 = vmatprep.subr.bf16.mxu0 0
    %1792 = vmatpush1.bf16.msra.mxu0 %v1381
    %1793 = vmatprep.subr.bf16.mxu0 0
    %1794 = vmatpush1.bf16.msra.mxu0 %v1382
    %1795 = vmatprep.subr.bf16.mxu0 0
    %1796 = vmatpush1.bf16.msra.mxu0 %v1383
    %1797 = vmatprep.subr.bf16.mxu0 0
    %1798 = vmatpush1.bf16.msra.mxu0 %v1384
    %1799 = vmatprep.subr.bf16.mxu0 0
    %1800 = vmatpush1.bf16.msra.mxu0 %v1385
    %1801 = vmatprep.subr.bf16.mxu0 0
    %1802 = vmatpush1.bf16.msra.mxu0 %v1386
    %1803 = vmatprep.subr.bf16.mxu0 0
    %1804 = vmatpush1.bf16.msra.mxu0 %v1387
    %1805 = vmatprep.subr.bf16.mxu0 0
    %1806 = vmatpush1.bf16.msra.mxu0 %v1388
    %1807 = vmatprep.subr.bf16.mxu0 0
    %1808 = vmatpush1.bf16.msra.mxu0 %v1389
    %1809 = vmatprep.subr.bf16.mxu0 0
    %1810 = vmatpush1.bf16.msra.mxu0 %v1390
    %1811 = vmatprep.subr.bf16.mxu0 0
    %1812 = vmatpush1.bf16.msra.mxu0 %v1391
    %1813 = vmatprep.subr.bf16.mxu0 0
    %1814 = vmatpush1.bf16.msra.mxu0 %v1392
    %1815 = vmatprep.subr.bf16.mxu0 0
    %1816 = vmatpush1.bf16.msra.mxu0 %v1393
    %1817 = vmatprep.subr.bf16.mxu0 0
    %1818 = vmatpush1.bf16.msra.mxu0 %v1394
    %1819 = vmatprep.mubr.bf16.mxu0 %v183
    %1820 = vmatmul.mubr.bf16.gmra.mrb[0].mxu0 %v182
    %v1821 = vpop.f32.mrb[0].mxu0
    %v1822 = vadd.f32 %v1782, %v1821
    %v1823 = vpop.f32.mrb[0].mxu0
    %v1824 = vpop.f32.mrb[0].mxu0
    %v1825 = vpop.f32.mrb[0].mxu0
    %1826 = vdwg.mxu0
    %1827 = vmatprep.subr.bf16.mxu0 0
    %1828 = vmatpush1.bf16.msra.mxu0 %v1395
    %1829 = vmatprep.subr.bf16.mxu0 0
    %1830 = vmatpush1.bf16.msra.mxu0 %v1396
    %1831 = vmatprep.subr.bf16.mxu0 0
    %1832 = vmatpush1.bf16.msra.mxu0 %v1397
    %1833 = vmatprep.subr.bf16.mxu0 0
    %1834 = vmatpush1.bf16.msra.mxu0 %v1398
    %1835 = vmatprep.subr.bf16.mxu0 0
    %1836 = vmatpush1.bf16.msra.mxu0 %v1399
    %1837 = vmatprep.subr.bf16.mxu0 0
    %1838 = vmatpush1.bf16.msra.mxu0 %v1400
    %1839 = vmatprep.subr.bf16.mxu0 0
    %1840 = vmatpush1.bf16.msra.mxu0 %v1401
    %1841 = vmatprep.subr.bf16.mxu0 0
    %1842 = vmatpush1.bf16.msra.mxu0 %v1402
    %1843 = vmatprep.subr.bf16.mxu0 0
    %1844 = vmatpush1.bf16.msra.mxu0 %v1403
    %1845 = vmatprep.subr.bf16.mxu0 0
    %1846 = vmatpush1.bf16.msra.mxu0 %v1404
    %1847 = vmatprep.subr.bf16.mxu0 0
    %1848 = vmatpush1.bf16.msra.mxu0 %v1405
    %1849 = vmatprep.subr.bf16.mxu0 0
    %1850 = vmatpush1.bf16.msra.mxu0 %v1406
    %1851 = vmatprep.subr.bf16.mxu0 0
    %1852 = vmatpush1.bf16.msra.mxu0 %v1407
    %1853 = vmatprep.subr.bf16.mxu0 0
    %1854 = vmatpush1.bf16.msra.mxu0 %v1408
    %1855 = vmatprep.subr.bf16.mxu0 0
    %1856 = vmatpush1.bf16.msra.mxu0 %v1409
    %1857 = vmatprep.subr.bf16.mxu0 0
    %1858 = vmatpush1.bf16.msra.mxu0 %v1410
    %1859 = vmatprep.mubr.bf16.mxu0 %v185
    %1860 = vmatmul.mubr.bf16.gmra.mrb[0].mxu0 %v184
    %v1861 = vpop.f32.mrb[0].mxu0
    %v1862 = vadd.f32 %v1822, %v1861
    %v1863 = vpop.f32.mrb[0].mxu0
    %v1864 = vpop.f32.mrb[0].mxu0
    %v1865 = vpop.f32.mrb[0].mxu0
    %1866 = vdwg.mxu0
    %1867 = vmatprep.subr.bf16.mxu0 0
    %1868 = vmatpush1.bf16.msra.mxu0 %v1411
    %1869 = vmatprep.subr.bf16.mxu0 0
    %1870 = vmatpush1.bf16.msra.mxu0 %v1412
    %1871 = vmatprep.subr.bf16.mxu0 0
    %1872 = vmatpush1.bf16.msra.mxu0 %v1413
    %1873 = vmatprep.subr.bf16.mxu0 0
    %1874 = vmatpush1.bf16.msra.mxu0 %v1414
    %1875 = vmatprep.subr.bf16.mxu0 0
    %1876 = vmatpush1.bf16.msra.mxu0 %v1415
    %1877 = vmatprep.subr.bf16.mxu0 0
    %1878 = vmatpush1.bf16.msra.mxu0 %v1416
    %1879 = vmatprep.subr.bf16.mxu0 0
    %1880 = vmatpush1.bf16.msra.mxu0 %v1417
    %1881 = vmatprep.subr.bf16.mxu0 0
    %1882 = vmatpush1.bf16.msra.mxu0 %v1418
    %1883 = vmatprep.subr.bf16.mxu0 0
    %1884 = vmatpush1.bf16.msra.mxu0 %v1419
    %1885 = vmatprep.subr.bf16.mxu0 0
    %1886 = vmatpush1.bf16.msra.mxu0 %v1420
    %1887 = vmatprep.subr.bf16.mxu0 0
    %1888 = vmatpush1.bf16.msra.mxu0 %v1421
    %1889 = vmatprep.subr.bf16.mxu0 0
    %1890 = vmatpush1.bf16.msra.mxu0 %v1422
    %1891 = vmatprep.subr.bf16.mxu0 0
    %1892 = vmatpush1.bf16.msra.mxu0 %v1423
    %1893 = vmatprep.subr.bf16.mxu0 0
    %1894 = vmatpush1.bf16.msra.mxu0 %v1424
    %1895 = vmatprep.subr.bf16.mxu0 0
    %1896 = vmatpush1.bf16.msra.mxu0 %v1425
    %1897 = vmatprep.subr.bf16.mxu0 0
    %1898 = vmatpush1.bf16.msra.mxu0 %v1426
    %1899 = vmatprep.mubr.bf16.mxu0 %v187
    %1900 = vmatmul.mubr.bf16.gmra.mrb[0].mxu0 %v186
    %v1901 = vpop.f32.mrb[0].mxu0
    %v1902 = vadd.f32 %v1862, %v1901
    %v1903 = vpop.f32.mrb[0].mxu0
    %v1904 = vpop.f32.mrb[0].mxu0
    %v1905 = vpop.f32.mrb[0].mxu0
    %1906 = vdwg.mxu0
    %1907 = vmatprep.subr.bf16.mxu0 0
    %1908 = vmatpush1.bf16.msra.mxu0 %v1427
    %1909 = vmatprep.subr.bf16.mxu0 0
    %1910 = vmatpush1.bf16.msra.mxu0 %v1428
    %1911 = vmatprep.subr.bf16.mxu0 0
    %1912 = vmatpush1.bf16.msra.mxu0 %v1429
    %1913 = vmatprep.subr.bf16.mxu0 0
    %1914 = vmatpush1.bf16.msra.mxu0 %v1430
    %1915 = vmatprep.subr.bf16.mxu0 0
    %1916 = vmatpush1.bf16.msra.mxu0 %v1431
    %1917 = vmatprep.subr.bf16.mxu0 0
    %1918 = vmatpush1.bf16.msra.mxu0 %v1432
    %1919 = vmatprep.subr.bf16.mxu0 0
    %1920 = vmatpush1.bf16.msra.mxu0 %v1433
    %1921 = vmatprep.subr.bf16.mxu0 0
    %1922 = vmatpush1.bf16.msra.mxu0 %v1434
    %1923 = vmatprep.subr.bf16.mxu0 0
    %1924 = vmatpush1.bf16.msra.mxu0 %v1435
    %1925 = vmatprep.subr.bf16.mxu0 0
    %1926 = vmatpush1.bf16.msra.mxu0 %v1436
    %1927 = vmatprep.subr.bf16.mxu0 0
    %1928 = vmatpush1.bf16.msra.mxu0 %v1437
    %1929 = vmatprep.subr.bf16.mxu0 0
    %1930 = vmatpush1.bf16.msra.mxu0 %v1438
    %1931 = vmatprep.subr.bf16.mxu0 0
    %1932 = vmatpush1.bf16.msra.mxu0 %v1439
    %1933 = vmatprep.subr.bf16.mxu0 0
    %1934 = vmatpush1.bf16.msra.mxu0 %v1440
    %1935 = vmatprep.subr.bf16.mxu0 0
    %1936 = vmatpush1.bf16.msra.mxu0 %v1441
    %1937 = vmatprep.subr.bf16.mxu0 0
    %1938 = vmatpush1.bf16.msra.mxu0 %v1442
    %1939 = vmatprep.mubr.bf16.mxu0 %v189
    %1940 = vmatmul.mubr.bf16.gmra.mrb[0].mxu0 %v188
    %v1941 = vpop.f32.mrb[0].mxu0
    %v1942 = vadd.f32 %v1902, %v1941
    %v1943 = vpop.f32.mrb[0].mxu0
    %v1944 = vpop.f32.mrb[0].mxu0
    %v1945 = vpop.f32.mrb[0].mxu0
    %1946 = vdwg.mxu0
    %1947 = vmatprep.subr.bf16.mxu0 0
    %1948 = vmatpush1.bf16.msra.mxu0 %v1443
    %1949 = vmatprep.subr.bf16.mxu0 0
    %1950 = vmatpush1.bf16.msra.mxu0 %v1444
    %1951 = vmatprep.subr.bf16.mxu0 0
    %1952 = vmatpush1.bf16.msra.mxu0 %v1445
    %1953 = vmatprep.subr.bf16.mxu0 0
    %1954 = vmatpush1.bf16.msra.mxu0 %v1446
    %1955 = vmatprep.subr.bf16.mxu0 0
    %1956 = vmatpush1.bf16.msra.mxu0 %v1447
    %1957 = vmatprep.subr.bf16.mxu0 0
    %1958 = vmatpush1.bf16.msra.mxu0 %v1448
    %1959 = vmatprep.subr.bf16.mxu0 0
    %1960 = vmatpush1.bf16.msra.mxu0 %v1449
    %1961 = vmatprep.subr.bf16.mxu0 0
    %1962 = vmatpush1.bf16.msra.mxu0 %v1450
    %1963 = vmatprep.subr.bf16.mxu0 0
    %1964 = vmatpush1.bf16.msra.mxu0 %v1451
    %1965 = vmatprep.subr.bf16.mxu0 0
    %1966 = vmatpush1.bf16.msra.mxu0 %v1452
    %1967 = vmatprep.subr.bf16.mxu0 0
    %1968 = vmatpush1.bf16.msra.mxu0 %v1453
    %1969 = vmatprep.subr.bf16.mxu0 0
    %1970 = vmatpush1.bf16.msra.mxu0 %v1454
    %1971 = vmatprep.subr.bf16.mxu0 0
    %1972 = vmatpush1.bf16.msra.mxu0 %v1455
    %1973 = vmatprep.subr.bf16.mxu0 0
    %1974 = vmatpush1.bf16.msra.mxu0 %v1456
    %1975 = vmatprep.subr.bf16.mxu0 0
    %1976 = vmatpush1.bf16.msra.mxu0 %v1457
    %1977 = vmatprep.subr.bf16.mxu0 0
    %1978 = vmatpush1.bf16.msra.mxu0 %v1458
    %1979 = vmatprep.mubr.bf16.mxu0 %v191
    %1980 = vmatmul.mubr.bf16.gmra.mrb[0].mxu0 %v190
    %v1981 = vpop.f32.mrb[0].mxu0
    %v1982 = vadd.f32 %v1942, %v1981
    %v1983 = vpop.f32.mrb[0].mxu0
    %v1984 = vpop.f32.mrb[0].mxu0
    %v1985 = vpop.f32.mrb[0].mxu0
    %1986 = vdwg.mxu0
    %1987 = vmatprep.subr.bf16.mxu0 0
    %1988 = vmatpush1.bf16.msra.mxu0 %v1459
    %1989 = vmatprep.subr.bf16.mxu0 0
    %1990 = vmatpush1.bf16.msra.mxu0 %v1460
    %1991 = vmatprep.subr.bf16.mxu0 0
    %1992 = vmatpush1.bf16.msra.mxu0 %v1461
    %1993 = vmatprep.subr.bf16.mxu0 0
    %1994 = vmatpush1.bf16.msra.mxu0 %v1462
    %1995 = vmatprep.subr.bf16.mxu0 0
    %1996 = vmatpush1.bf16.msra.mxu0 %v1463
    %1997 = vmatprep.subr.bf16.mxu0 0
    %1998 = vmatpush1.bf16.msra.mxu0 %v1464
    %1999 = vmatprep.subr.bf16.mxu0 0
    %2000 = vmatpush1.bf16.msra.mxu0 %v1465
    %2001 = vmatprep.subr.bf16.mxu0 0
    %2002 = vmatpush1.bf16.msra.mxu0 %v1466
    %2003 = vmatprep.subr.bf16.mxu0 0
    %2004 = vmatpush1.bf16.msra.mxu0 %v1467
    %2005 = vmatprep.subr.bf16.mxu0 0
    %2006 = vmatpush1.bf16.msra.mxu0 %v1468
    %2007 = vmatprep.subr.bf16.mxu0 0
    %2008 = vmatpush1.bf16.msra.mxu0 %v1469
    %2009 = vmatprep.subr.bf16.mxu0 0
    %2010 = vmatpush1.bf16.msra.mxu0 %v1470
    %2011 = vmatprep.subr.bf16.mxu0 0
    %2012 = vmatpush1.bf16.msra.mxu0 %v1471
    %2013 = vmatprep.subr.bf16.mxu0 0
    %2014 = vmatpush1.bf16.msra.mxu0 %v1472
    %2015 = vmatprep.subr.bf16.mxu0 0
    %2016 = vmatpush1.bf16.msra.mxu0 %v1473
    %2017 = vmatprep.subr.bf16.mxu0 0
    %2018 = vmatpush1.bf16.msra.mxu0 %v1474
    %2019 = vmatprep.mubr.bf16.mxu0 %v193
    %2020 = vmatmul.mubr.bf16.gmra.mrb[0].mxu0 %v192
    %v2021 = vpop.f32.mrb[0].mxu0
    %v2022 = vadd.f32 %v1982, %v2021
    %v2023 = vpop.f32.mrb[0].mxu0
    %v2024 = vpop.f32.mrb[0].mxu0
    %v2025 = vpop.f32.mrb[0].mxu0
    %2026 = vdwg.mxu0
    %2027 = vmatprep.subr.bf16.mxu0 0
    %2028 = vmatpush1.bf16.msra.mxu0 %v1475
    %2029 = vmatprep.subr.bf16.mxu0 0
    %2030 = vmatpush1.bf16.msra.mxu0 %v1476
    %2031 = vmatprep.subr.bf16.mxu0 0
    %2032 = vmatpush1.bf16.msra.mxu0 %v1477
    %2033 = vmatprep.subr.bf16.mxu0 0
    %2034 = vmatpush1.bf16.msra.mxu0 %v1478
    %2035 = vmatprep.subr.bf16.mxu0 0
    %2036 = vmatpush1.bf16.msra.mxu0 %v1479
    %2037 = vmatprep.subr.bf16.mxu0 0
    %2038 = vmatpush1.bf16.msra.mxu0 %v1480
    %2039 = vmatprep.subr.bf16.mxu0 0
    %2040 = vmatpush1.bf16.msra.mxu0 %v1481
    %2041 = vmatprep.subr.bf16.mxu0 0
    %2042 = vmatpush1.bf16.msra.mxu0 %v1482
    %2043 = vmatprep.subr.bf16.mxu0 0
    %2044 = vmatpush1.bf16.msra.mxu0 %v1483
    %2045 = vmatprep.subr.bf16.mxu0 0
    %2046 = vmatpush1.bf16.msra.mxu0 %v1484
    %2047 = vmatprep.subr.bf16.mxu0 0
    %2048 = vmatpush1.bf16.msra.mxu0 %v1485
    %2049 = vmatprep.subr.bf16.mxu0 0
    %2050 = vmatpush1.bf16.msra.mxu0 %v1486
    %2051 = vmatprep.subr.bf16.mxu0 0
    %2052 = vmatpush1.bf16.msra.mxu0 %v1487
    %2053 = vmatprep.subr.bf16.mxu0 0
    %2054 = vmatpush1.bf16.msra.mxu0 %v1488
    %2055 = vmatprep.subr.bf16.mxu0 0
    %2056 = vmatpush1.bf16.msra.mxu0 %v1489
    %2057 = vmatprep.subr.bf16.mxu0 0
    %2058 = vmatpush1.bf16.msra.mxu0 %v1490
    %2059 = vmatprep.mubr.bf16.mxu0 %v195
    %2060 = vmatmul.mubr.bf16.gmra.mrb[0].mxu0 %v194
    %v2061 = vpop.f32.mrb[0].mxu0
    %v2062 = vadd.f32 %v2022, %v2061
    %v2063 = vpop.f32.mrb[0].mxu0
    %v2064 = vpop.f32.mrb[0].mxu0
    %v2065 = vpop.f32.mrb[0].mxu0
    %2066 = vdwg.mxu0
    %2067 = vmatprep.subr.bf16.mxu0 0
    %2068 = vmatpush1.bf16.msra.mxu0 %v1491
    %2069 = vmatprep.subr.bf16.mxu0 0
    %2070 = vmatpush1.bf16.msra.mxu0 %v1492
    %2071 = vmatprep.subr.bf16.mxu0 0
    %2072 = vmatpush1.bf16.msra.mxu0 %v1493
    %2073 = vmatprep.subr.bf16.mxu0 0
    %2074 = vmatpush1.bf16.msra.mxu0 %v1494
    %2075 = vmatprep.subr.bf16.mxu0 0
    %2076 = vmatpush1.bf16.msra.mxu0 %v1495
    %2077 = vmatprep.subr.bf16.mxu0 0
    %2078 = vmatpush1.bf16.msra.mxu0 %v1496
    %2079 = vmatprep.subr.bf16.mxu0 0
    %2080 = vmatpush1.bf16.msra.mxu0 %v1497
    %2081 = vmatprep.subr.bf16.mxu0 0
    %2082 = vmatpush1.bf16.msra.mxu0 %v1498
    %2083 = vmatprep.subr.bf16.mxu0 0
    %2084 = vmatpush1.bf16.msra.mxu0 %v1499
    %2085 = vmatprep.subr.bf16.mxu0 0
    %2086 = vmatpush1.bf16.msra.mxu0 %v1500
    %2087 = vmatprep.subr.bf16.mxu0 0
    %2088 = vmatpush1.bf16.msra.mxu0 %v1501
    %2089 = vmatprep.subr.bf16.mxu0 0
    %2090 = vmatpush1.bf16.msra.mxu0 %v1502
    %2091 = vmatprep.subr.bf16.mxu0 0
    %2092 = vmatpush1.bf16.msra.mxu0 %v1503
    %2093 = vmatprep.subr.bf16.mxu0 0
    %2094 = vmatpush1.bf16.msra.mxu0 %v1504
    %2095 = vmatprep.subr.bf16.mxu0 0
    %2096 = vmatpush1.bf16.msra.mxu0 %v1505
    %2097 = vmatprep.subr.bf16.mxu0 0
    %2098 = vmatpush1.bf16.msra.mxu0 %v1506
    %2099 = vmatprep.mubr.bf16.mxu0 %v197
    %2100 = vmatmul.mubr.bf16.gmra.mrb[0].mxu0 %v196
    %v2101 = vpop.f32.mrb[0].mxu0
    %v2102 = vadd.f32 %v2062, %v2101
    %v2103 = vpop.f32.mrb[0].mxu0
    %v2104 = vpop.f32.mrb[0].mxu0
    %v2105 = vpop.f32.mrb[0].mxu0
    %2106 = vdwg.mxu0
    %2107 = vmatprep.subr.bf16.mxu0 0
    %2108 = vmatpush1.bf16.msra.mxu0 %v1507
    %2109 = vmatprep.subr.bf16.mxu0 0
    %2110 = vmatpush1.bf16.msra.mxu0 %v1508
    %2111 = vmatprep.subr.bf16.mxu0 0
    %2112 = vmatpush1.bf16.msra.mxu0 %v1509
    %2113 = vmatprep.subr.bf16.mxu0 0
    %2114 = vmatpush1.bf16.msra.mxu0 %v1510
    %2115 = vmatprep.subr.bf16.mxu0 0
    %2116 = vmatpush1.bf16.msra.mxu0 %v1511
    %2117 = vmatprep.subr.bf16.mxu0 0
    %2118 = vmatpush1.bf16.msra.mxu0 %v1512
    %2119 = vmatprep.subr.bf16.mxu0 0
    %2120 = vmatpush1.bf16.msra.mxu0 %v1513
    %2121 = vmatprep.subr.bf16.mxu0 0
    %2122 = vmatpush1.bf16.msra.mxu0 %v1514
    %2123 = vmatprep.subr.bf16.mxu0 0
    %2124 = vmatpush1.bf16.msra.mxu0 %v1515
    %2125 = vmatprep.subr.bf16.mxu0 0
    %2126 = vmatpush1.bf16.msra.mxu0 %v1516
    %2127 = vmatprep.subr.bf16.mxu0 0
    %2128 = vmatpush1.bf16.msra.mxu0 %v1517
    %2129 = vmatprep.subr.bf16.mxu0 0
    %2130 = vmatpush1.bf16.msra.mxu0 %v1518
    %2131 = vmatprep.subr.bf16.mxu0 0
    %2132 = vmatpush1.bf16.msra.mxu0 %v1519
    %2133 = vmatprep.subr.bf16.mxu0 0
    %2134 = vmatpush1.bf16.msra.mxu0 %v1520
    %2135 = vmatprep.subr.bf16.mxu0 0
    %2136 = vmatpush1.bf16.msra.mxu0 %v1521
    %2137 = vmatprep.subr.bf16.mxu0 0
    %2138 = vmatpush1.bf16.msra.mxu0 %v1522
    %2139 = vmatprep.mubr.bf16.mxu0 %v199
    %2140 = vmatmul.mubr.bf16.gmra.mrb[0].mxu0 %v198
    %v2141 = vpop.f32.mrb[0].mxu0
    %v2142 = vadd.f32 %v2102, %v2141
    %v2143 = vpop.f32.mrb[0].mxu0
    %v2144 = vpop.f32.mrb[0].mxu0
    %v2145 = vpop.f32.mrb[0].mxu0
    %2146 = vdwg.mxu0
    %2147 = vmatprep.subr.bf16.mxu0 0
    %2148 = vmatpush1.bf16.msra.mxu0 %v1523
    %2149 = vmatprep.subr.bf16.mxu0 0
    %2150 = vmatpush1.bf16.msra.mxu0 %v1524
    %2151 = vmatprep.subr.bf16.mxu0 0
    %2152 = vmatpush1.bf16.msra.mxu0 %v1525
    %2153 = vmatprep.subr.bf16.mxu0 0
    %2154 = vmatpush1.bf16.msra.mxu0 %v1526
    %2155 = vmatprep.subr.bf16.mxu0 0
    %2156 = vmatpush1.bf16.msra.mxu0 %v1527
    %2157 = vmatprep.subr.bf16.mxu0 0
    %2158 = vmatpush1.bf16.msra.mxu0 %v1528
    %2159 = vmatprep.subr.bf16.mxu0 0
    %2160 = vmatpush1.bf16.msra.mxu0 %v1529
    %2161 = vmatprep.subr.bf16.mxu0 0
    %2162 = vmatpush1.bf16.msra.mxu0 %v1530
    %2163 = vmatprep.subr.bf16.mxu0 0
    %2164 = vmatpush1.bf16.msra.mxu0 %v1531
    %2165 = vmatprep.subr.bf16.mxu0 0
    %2166 = vmatpush1.bf16.msra.mxu0 %v1532
    %2167 = vmatprep.subr.bf16.mxu0 0
    %2168 = vmatpush1.bf16.msra.mxu0 %v1533
    %2169 = vmatprep.subr.bf16.mxu0 0
    %2170 = vmatpush1.bf16.msra.mxu0 %v1534
    %2171 = vmatprep.subr.bf16.mxu0 0
    %2172 = vmatpush1.bf16.msra.mxu0 %v1535
    %2173 = vmatprep.subr.bf16.mxu0 0
    %2174 = vmatpush1.bf16.msra.mxu0 %v1536
    %2175 = vmatprep.subr.bf16.mxu0 0
    %2176 = vmatpush1.bf16.msra.mxu0 %v1537
    %2177 = vmatprep.subr.bf16.mxu0 0
    %2178 = vmatpush1.bf16.msra.mxu0 %v1538
    %2179 = vmatprep.mubr.bf16.mxu0 %v201
    %2180 = vmatmul.mubr.bf16.gmra.mrb[0].mxu0 %v200
    %v2181 = vpop.f32.mrb[0].mxu0
    %v2182 = vadd.f32 %v2142, %v2181
    %v2183 = vpop.f32.mrb[0].mxu0
    %v2184 = vpop.f32.mrb[0].mxu0
    %v2185 = vpop.f32.mrb[0].mxu0
    %2186 = vdwg.mxu0
    %2187 = vmatprep.subr.bf16.mxu0 0
    %2188 = vmatpush1.bf16.msra.mxu0 %v1539
    %2189 = vmatprep.subr.bf16.mxu0 0
    %2190 = vmatpush1.bf16.msra.mxu0 %v1540
    %2191 = vmatprep.subr.bf16.mxu0 0
    %2192 = vmatpush1.bf16.msra.mxu0 %v1541
    %2193 = vmatprep.subr.bf16.mxu0 0
    %2194 = vmatpush1.bf16.msra.mxu0 %v1542
    %2195 = vmatprep.subr.bf16.mxu0 0
    %2196 = vmatpush1.bf16.msra.mxu0 %v1543
    %2197 = vmatprep.subr.bf16.mxu0 0
    %2198 = vmatpush1.bf16.msra.mxu0 %v1544
    %2199 = vmatprep.subr.bf16.mxu0 0
    %2200 = vmatpush1.bf16.msra.mxu0 %v1545
    %2201 = vmatprep.subr.bf16.mxu0 0
    %2202 = vmatpush1.bf16.msra.mxu0 %v1546
    %2203 = vmatprep.subr.bf16.mxu0 0
    %2204 = vmatpush1.bf16.msra.mxu0 %v1547
    %2205 = vmatprep.subr.bf16.mxu0 0
    %2206 = vmatpush1.bf16.msra.mxu0 %v1548
    %2207 = vmatprep.subr.bf16.mxu0 0
    %2208 = vmatpush1.bf16.msra.mxu0 %v1549
    %2209 = vmatprep.subr.bf16.mxu0 0
    %2210 = vmatpush1.bf16.msra.mxu0 %v1550
    %2211 = vmatprep.subr.bf16.mxu0 0
    %2212 = vmatpush1.bf16.msra.mxu0 %v1551
    %2213 = vmatprep.subr.bf16.mxu0 0
    %2214 = vmatpush1.bf16.msra.mxu0 %v1552
    %2215 = vmatprep.subr.bf16.mxu0 0
    %2216 = vmatpush1.bf16.msra.mxu0 %v1553
    %2217 = vmatprep.subr.bf16.mxu0 0
    %2218 = vmatpush1.bf16.msra.mxu0 %v1554
    %2219 = vmatprep.mubr.bf16.mxu0 %v203
    %2220 = vmatmul.mubr.bf16.gmra.mrb[0].mxu0 %v202
    %v2221 = vpop.f32.mrb[0].mxu0
    %v2222 = vadd.f32 %v2182, %v2221
    %v2223 = vpop.f32.mrb[0].mxu0
    %v2224 = vpop.f32.mrb[0].mxu0
    %v2225 = vpop.f32.mrb[0].mxu0
    %2226 = vdwg.mxu0
    %2227 = vst [vmem:[#allocation7] sm:$0x3] %v2222
    // Predicated region
    $region22: #{tpu_custom_call.1} parent=1 // pred_check
      _
    $region23: #{tpu_custom_call.1} parent=1 // pred_check_branch
      %2229 = sbr.rel (0) target = $region25
    $region24: #{tpu_custom_call.1} parent=1 // pred_region
      %s2231 = ssub.s32 32, 32
      %2232 = vsyncadd [#allocation4], %s2231
      %s2234 = sshll.u32 [#allocation7], 4
      %s2235 = int_to_ptr.vmem [resolvable:$true] %s2234
      %2237 = dma.vmem_to_hbm [thread:$0]  %s2235, 32, %s3, [#allocation4]
    $region25: #{tpu_custom_call.1} parent=1 // pred_fallthru
      _
    // Predicated region
    $region26: #{tpu_custom_call.1} parent=1 // pred_check
      _
    $region27: #{tpu_custom_call.1} parent=1 // pred_check_branch
      %2239 = sbr.rel (0) target = $region29
    $region28: #{tpu_custom_call.1} parent=1 // pred_region
      %2240 = dma.done [#allocation4], 32
    $region29: #{tpu_custom_call.1} parent=1 // pred_fallthru
      _
    %2241 = vsyncpa [#allocation3], 1
    %2242 = vsyncpa [#allocation6], 1
    %2243 = vsyncpa [#allocation4], 1

</llo_original>
